<compile_context>
chip_gen: v7x
topology: tpu7x:2x2x1
jax: 0.10.0
libtpu: 0.0.40
codegen_flags: <defaults>
</compile_context>

<pallas_src>
import functools

import jax
import jax.numpy as jnp
from jax.experimental import pallas as pl
from jax.experimental.pallas import tpu as pltpu


def _round_up(x, m):
    return ((x + m - 1) // m) * m


# ----------------------------- Pallas kernel --------------------------------

def _fused_sr_kernel(patches_ref, cc_ref,
                     conv_w_ref, conv_b_ref,
                     w1f_ref, w1cc_ref, w1d_ref, b1_ref,
                     w2_ref, b2_ref, w3_ref, b3_ref,
                     o_ref,
                     feat_sc, dctx_sc,
                     *, hw, hwp, img_h, img_w, cd):
    """Per grid step (b, q):
       q == 0 : one merged conv matmul over the whole batch-b im2col block ->
                SR feature map (kept in VMEM scratch) + degradation-encoder GAP
                (its fc1 contribution cached in scratch).
       every q: derive sample indices from coord, one-hot MXU gather from the
                VMEM feature map, split-fc1 -> fc2 -> fc3 (gt affine folded),
                clamp to [0, 1]."""
    q = pl.program_id(1)

    # ---- per-batch prologue: fused dual-branch conv ----
    @pl.when(q == 0)
    def _():
        p = patches_ref[0]                                    # [HWp, K] bf16 (raw input)
        conv = jnp.dot(p, conv_w_ref[...],
                       preferred_element_type=jnp.float32)    # [HWp, Cd+Cf]
        conv = jnp.maximum(conv + conv_b_ref[...], 0.0)
        enc = conv[:, :cd]          # frozen degradation encoder branch (raw input)
        feat = conv[:, cd:]         # SR feature branch (input norm folded into weights)
        feat_sc[...] = feat.astype(feat_sc.dtype)
        # global average pool over the real H*W rows only
        row = jax.lax.broadcasted_iota(jnp.int32, (hwp, 1), 0)
        enc = jnp.where(row < hw, enc, 0.0)
        d_feat = jnp.sum(enc, axis=0, keepdims=True) * (1.0 / hw)          # [1, Cd]
        dctx_sc[...] = jnp.dot(d_feat.astype(jnp.bfloat16), w1d_ref[...],
                               preferred_element_type=jnp.float32)         # [1, H1]

    # ---- per-query-tile body: in-kernel gather + MLP head ----
    cc = cc_ref[0]                                            # [TQ, 4] f32 = [coord | cell]
    tq = cc.shape[0]
    # nearest-neighbour sample index from coord in [-1, 1]
    # TODO(synk): reference LIIF uses bilinear/local-ensemble sampling.
    iy = jnp.clip(jnp.floor((cc[:, 0:1] + 1.0) * (0.5 * img_h)), 0.0, img_h - 1.0)
    ix = jnp.clip(jnp.floor((cc[:, 1:2] + 1.0) * (0.5 * img_w)), 0.0, img_w - 1.0)
    flat = iy.astype(jnp.int32) * img_w + ix.astype(jnp.int32)             # [TQ, 1]
    cols = jax.lax.broadcasted_iota(jnp.int32, (tq, hwp), 1)
    onehot = (cols == flat).astype(jnp.bfloat16)                           # [TQ, HWp]
    sampled = jnp.dot(onehot, feat_sc[...],
                      preferred_element_type=jnp.float32)                  # [TQ, Cf]

    # fc1 split over [feat | coord,cell | d_feat] -> no concat / broadcast needed
    h1 = (jnp.dot(sampled.astype(jnp.bfloat16), w1f_ref[...],
                  preferred_element_type=jnp.float32)
          + jnp.dot(cc.astype(jnp.bfloat16), w1cc_ref[...],
                    preferred_element_type=jnp.float32)
          + dctx_sc[...] + b1_ref[...])
    h1 = jnp.maximum(h1, 0.0)
    h2 = jnp.dot(h1.astype(jnp.bfloat16), w2_ref[...],
                 preferred_element_type=jnp.float32)
    h2 = jnp.maximum(h2 + b2_ref[...], 0.0)
    y = jnp.dot(h2.astype(jnp.bfloat16), w3_ref[...],
                preferred_element_type=jnp.float32) + b3_ref[...]          # gt affine folded
    o_ref[0] = jnp.clip(y, 0.0, 1.0)


# ------------------------------- wrapper -------------------------------------

def fused_forward(patches, cc, conv_w, conv_b,
                  w1f, w1cc, w1d, b1, w2, b2, w3, b3,
                  *, hw, img_h, img_w, cd, tq):
    """patches: [B, HWp, K] bf16 (raw im2col), cc: [B, Qp, 4] f32.
    Returns [B, Qp, 3] f32 in [0, 1]."""
    B, HWp, K = patches.shape
    _, Qp, _ = cc.shape
    Ctot = conv_w.shape[1]
    Cf = w1f.shape[0]
    H1 = w1f.shape[1]
    H2 = w2.shape[1]
    Nout = w3.shape[1]
    grid = (B, Qp // tq)
    kern = functools.partial(_fused_sr_kernel, hw=hw, hwp=HWp,
                             img_h=img_h, img_w=img_w, cd=cd)
    return pl.pallas_call(
        kern,
        grid=grid,
        in_specs=[
            pl.BlockSpec((1, HWp, K), lambda b, q: (b, 0, 0)),   # im2col block (per batch)
            pl.BlockSpec((1, tq, 4), lambda b, q: (b, q, 0)),    # [coord|cell] tile
            pl.BlockSpec((K, Ctot), lambda b, q: (0, 0)),        # merged conv weight
            pl.BlockSpec((1, Ctot), lambda b, q: (0, 0)),        # merged conv bias
            pl.BlockSpec((Cf, H1), lambda b, q: (0, 0)),         # fc1 (feature part)
            pl.BlockSpec((4, H1), lambda b, q: (0, 0)),          # fc1 (coord|cell part)
            pl.BlockSpec((cd, H1), lambda b, q: (0, 0)),         # fc1 (degrade-feat part)
            pl.BlockSpec((1, H1), lambda b, q: (0, 0)),          # b1
            pl.BlockSpec((H1, H2), lambda b, q: (0, 0)),         # fc2
            pl.BlockSpec((1, H2), lambda b, q: (0, 0)),          # b2
            pl.BlockSpec((H2, Nout), lambda b, q: (0, 0)),       # fc3 (gt_div folded)
            pl.BlockSpec((1, Nout), lambda b, q: (0, 0)),        # b3  (gt affine folded)
        ],
        out_specs=pl.BlockSpec((1, tq, Nout), lambda b, q: (b, q, 0)),
        out_shape=jax.ShapeDtypeStruct((B, Qp, Nout), jnp.float32),
        scratch_shapes=[
            pltpu.VMEM((HWp, Cf), jnp.bfloat16),   # SR feature map (never leaves VMEM)
            pltpu.VMEM((1, H1), jnp.float32),      # d_feat @ w1_d contribution
        ],
        compiler_params=pltpu.CompilerParams(
            dimension_semantics=("parallel", "arbitrary"),
            vmem_limit_bytes=32 * 1024 * 1024,
        ),
    )(patches, cc, conv_w, conv_b, w1f, w1cc, w1d, b1, w2, b2, w3, b3)


# ------------------------------ JAX glue --------------------------------------

def im2col_3x3(x):
    """x: [B, C, H, W], 3x3 conv, stride 1, padding 1 -> [B, H*W, C*9].
    TODO(synk): in-kernel 3x3 windowing (C=3 lane width makes the in-kernel
    reshape/relayout risky in Mosaic), so this stays as XLA glue."""
    B, C, H, W = x.shape
    xp = jnp.pad(x, ((0, 0), (0, 0), (1, 1), (1, 1)))
    cols = [xp[:, :, dy:dy + H, dx:dx + W] for dy in range(3) for dx in range(3)]
    p = jnp.stack(cols, axis=2)            # [B, C, 9, H, W]
    p = p.transpose(0, 3, 4, 1, 2)         # [B, H, W, C, 9]
    return p.reshape(B, H * W, C * 9)


class PallasController:
    """Deterministic synthetic stand-in for the torch controller Model."""

    def __init__(self, key, cin=3, c_degrade=16, c_feat=32, hidden=64):
        self.cin, self.cd, self.cf, self.h = cin, c_degrade, c_feat, hidden
        K = cin * 9
        ks = jax.random.split(key, 6)

        def w(k, shape, scale=0.1):
            return scale * jax.random.normal(k, shape, dtype=jnp.float32)

        # frozen degradation encoder: conv3x3 (cin -> c_degrade) + ReLU + GAP (raw input)
        enc_w = w(ks[0], (K, c_degrade))
        enc_b = jnp.zeros((c_degrade,), jnp.float32)
        # SR feature extractor: conv3x3 (cin -> c_feat) on normalized input
        feat_w = w(ks[1], (K, c_feat))
        feat_b = jnp.zeros((c_feat,), jnp.float32)

        # data_norm buffers (torch: inp_sub/inp_div/gt_sub/gt_div)
        inp_sub = jnp.array([0.5, 0.5, 0.5], jnp.float32)
        inp_div = jnp.array([0.5, 0.5, 0.5], jnp.float32)
        gt_sub = jnp.array([0.5, 0.5, 0.5], jnp.float32)
        gt_div = jnp.array([0.5, 0.5, 0.5], jnp.float32)

        # Fold (x - sub) / div into the SR feature conv (im2col column order is c*9+kk):
        sub_k = jnp.repeat(inp_sub, 9)                       # [K]
        inv_div_k = jnp.repeat(1.0 / inp_div, 9)             # [K]
        feat_w_f = feat_w * inv_div_k[:, None]
        feat_b_f = feat_b - (sub_k * inv_div_k) @ feat_w

        # Merge encoder + SR conv into one weight: [K, Cd + Cf], encoder columns first.
        self.conv_w = jnp.concatenate([enc_w, feat_w_f], axis=1).astype(jnp.bfloat16)
        self.conv_b = jnp.concatenate([enc_b, feat_b_f])[None, :].astype(jnp.float32)

        # per-query MLP head on [feat | coord | cell | degrade_feat]; fc1 split to avoid
        # any in-kernel concat / d_feat broadcast.
        in_dim = c_feat + 2 + 2 + c_degrade
        fc1_w = w(ks[2], (in_dim, hidden))
        self.w1f = fc1_w[:c_feat].astype(jnp.bfloat16)
        self.w1cc = fc1_w[c_feat:c_feat + 4].astype(jnp.bfloat16)
        self.w1d = fc1_w[c_feat + 4:].astype(jnp.bfloat16)
        self.b1 = jnp.zeros((1, hidden), jnp.float32)
        self.w2 = w(ks[3], (hidden, hidden)).astype(jnp.bfloat16)
        self.b2 = jnp.zeros((1, hidden), jnp.float32)
        # Fold pred*gt_div + gt_sub into fc3.
        fc3_w = w(ks[4], (hidden, 3))
        fc3_b = jnp.zeros((3,), jnp.float32)
        self.w3 = (fc3_w * gt_div[None, :]).astype(jnp.bfloat16)
        self.b3 = (fc3_b * gt_div + gt_sub)[None, :].astype(jnp.float32)

    def __call__(self, lr, coord, cell):
        B, C, H, W = lr.shape
        Q = coord.shape[1]
        HW = H * W

        # --- im2col (XLA glue) + row padding, bf16 at the pallas boundary ---
        patches = im2col_3x3(lr)                                   # [B, HW, C*9]
        HWp = _round_up(HW, 8)
        if HWp != HW:
            patches = jnp.pad(patches, ((0, 0), (0, HWp - HW), (0, 0)))
        patches = patches.astype(jnp.bfloat16)

        # --- coord|cell packed per query; kernel derives sample indices from it ---
        cc = jnp.concatenate([coord, cell], axis=-1).astype(jnp.float32)   # [B, Q, 4]
        tq = min(512, _round_up(Q, 8))
        Qp = _round_up(Q, tq)
        if Qp != Q:
            cc = jnp.pad(cc, ((0, 0), (0, Qp - Q), (0, 0)))

        out = fused_forward(patches, cc, self.conv_w, self.conv_b,
                            self.w1f, self.w1cc, self.w1d, self.b1,
                            self.w2, self.b2, self.w3, self.b3,
                            hw=HW, img_h=H, img_w=W, cd=self.cd, tq=tq)
        return out[:, :Q, :]


# --------------------------------- main ---------------------------------------

if __name__ == "__main__":
    key = jax.random.PRNGKey(0)
    B, C, H, W, Q = 2, 3, 16, 16, 8
    k1, k2, k3, k4 = jax.random.split(key, 4)

    lr = jax.random.uniform(k1, (B, C, H, W), dtype=jnp.float32)            # NCHW, like torch
    coord = jax.random.uniform(k2, (B, Q, 2), minval=-1.0, maxval=1.0,
                               dtype=jnp.float32)
    cell = jnp.full((B, Q, 2), 2.0 / (2 * H), dtype=jnp.float32)            # 2x SR cell size

    model = PallasController(k4)
    out = model(lr, coord, cell)
    out = jax.block_until_ready(out)

    assert out.shape == (B, Q, 3)
    assert bool(jnp.all(jnp.isfinite(out)))
    assert bool(jnp.all(out >= 0.0)) and bool(jnp.all(out <= 1.0))
    print("KERNEL_OK")
</pallas_src>

<mosaic_0001>
module attributes {stable_mosaic.version = 11 : i64} {
  func.func @_fused_sr_kernel(%arg0: i32, %arg1: i32, %arg2: memref<1x256x27xbf16, #tpu.memory_space<vmem>>, %arg3: memref<1x8x4xf32, #tpu.memory_space<vmem>>, %arg4: memref<27x48xbf16, #tpu.memory_space<vmem>>, %arg5: memref<1x48xf32, #tpu.memory_space<vmem>>, %arg6: memref<32x64xbf16, #tpu.memory_space<vmem>>, %arg7: memref<4x64xbf16, #tpu.memory_space<vmem>>, %arg8: memref<16x64xbf16, #tpu.memory_space<vmem>>, %arg9: memref<1x64xf32, #tpu.memory_space<vmem>>, %arg10: memref<64x64xbf16, #tpu.memory_space<vmem>>, %arg11: memref<1x64xf32, #tpu.memory_space<vmem>>, %arg12: memref<64x3xbf16, #tpu.memory_space<vmem>>, %arg13: memref<1x3xf32, #tpu.memory_space<vmem>>, %arg14: memref<1x8x3xf32, #tpu.memory_space<vmem>>, %arg15: memref<256x32xbf16, #tpu.memory_space<vmem>>, %arg16: memref<1x64xf32, #tpu.memory_space<vmem>>) attributes {dimension_semantics = [#tpu.dimension_semantics<parallel>, #tpu.dimension_semantics<arbitrary>], iteration_bounds = array<i64: 2, 1>, scalar_prefetch = 0 : i64, scratch_operands = 2 : i64, tpu.core_type = #tpu.core_type<tc>, window_params = [{transform_indices = @transform_0, window_bounds = array<i64: 1, 256, 27>}, {transform_indices = @transform_1, window_bounds = array<i64: 1, 8, 4>}, {pipeline_mode = #tpu.pipeline_mode<synchronous>, transform_indices = @transform_2, window_bounds = array<i64: 27, 48>}, {pipeline_mode = #tpu.pipeline_mode<synchronous>, transform_indices = @transform_3, window_bounds = array<i64: 1, 48>}, {pipeline_mode = #tpu.pipeline_mode<synchronous>, transform_indices = @transform_4, window_bounds = array<i64: 32, 64>}, {pipeline_mode = #tpu.pipeline_mode<synchronous>, transform_indices = @transform_5, window_bounds = array<i64: 4, 64>}, {pipeline_mode = #tpu.pipeline_mode<synchronous>, transform_indices = @transform_6, window_bounds = array<i64: 16, 64>}, {pipeline_mode = #tpu.pipeline_mode<synchronous>, transform_indices = @transform_7, window_bounds = array<i64: 1, 64>}, {pipeline_mode = #tpu.pipeline_mode<synchronous>, transform_indices = @transform_8, window_bounds = array<i64: 64, 64>}, {pipeline_mode = #tpu.pipeline_mode<synchronous>, transform_indices = @transform_9, window_bounds = array<i64: 1, 64>}, {pipeline_mode = #tpu.pipeline_mode<synchronous>, transform_indices = @transform_10, window_bounds = array<i64: 64, 3>}, {pipeline_mode = #tpu.pipeline_mode<synchronous>, transform_indices = @transform_11, window_bounds = array<i64: 1, 3>}, {transform_indices = @transform_12, window_bounds = array<i64: 1, 8, 3>}]} {
    %c0_i32 = arith.constant 0 : i32
    %0 = arith.cmpi eq, %arg1, %c0_i32 : i32
    %1 = arith.extui %0 : i1 to i32
    %c0_i32_0 = arith.constant 0 : i32
    %2 = arith.cmpi ne, %1, %c0_i32_0 : i32
    scf.if %2 {
      %c0_40 = arith.constant 0 : index
      %c0_41 = arith.constant 0 : index
      %c0_42 = arith.constant 0 : index
      %74 = vector.load %arg2[%c0_40, %c0_41, %c0_42] : memref<1x256x27xbf16, #tpu.memory_space<vmem>>, vector<1x256x27xbf16>
      %75 = vector.shape_cast %74 : vector<1x256x27xbf16> to vector<256x27xbf16>
      %c0_43 = arith.constant 0 : index
      %c0_44 = arith.constant 0 : index
      %76 = vector.load %arg4[%c0_43, %c0_44] : memref<27x48xbf16, #tpu.memory_space<vmem>>, vector<27x48xbf16>
      %cst_45 = arith.constant dense<0.000000e+00> : vector<256x48xf32>
      %77 = tpu.matmul %75, %76, %cst_45 {dimension_numbers = #tpu.dot_dimension_numbers<[1], [0], [0], [1], [0, 0, 1, 1], [], []>} : vector<256x27xbf16>, vector<27x48xbf16>, vector<256x48xf32> -> vector<256x48xf32>
      %c0_46 = arith.constant 0 : index
      %c0_47 = arith.constant 0 : index
      %78 = vector.load %arg5[%c0_46, %c0_47] : memref<1x48xf32, #tpu.memory_space<vmem>>, vector<1x48xf32>
      %79 = vector.broadcast %78 : vector<1x48xf32> to vector<256x48xf32>
      %80 = arith.addf %77, %79 : vector<256x48xf32>
      %cst_48 = arith.constant 0.000000e+00 : f32
      %81 = vector.broadcast %cst_48 : f32 to vector<256x48xf32>
      %82 = arith.maximumf %80, %81 : vector<256x48xf32>
      %83 = vector.extract_strided_slice %82 {offsets = [0, 0], sizes = [256, 16], strides = [1, 1]} : vector<256x48xf32> to vector<256x16xf32>
      %84 = vector.extract_strided_slice %82 {offsets = [0, 16], sizes = [256, 32], strides = [1, 1]} : vector<256x48xf32> to vector<256x32xf32>
      %85 = arith.truncf %84 : vector<256x32xf32> to vector<256x32xbf16>
      %c0_49 = arith.constant 0 : index
      %c0_50 = arith.constant 0 : index
      %86 = vector.load %arg15[%c0_49, %c0_50] : memref<256x32xbf16, #tpu.memory_space<vmem>>, vector<256x32xbf16>
      tpu.vector_store %arg15[%c0_49, %c0_50], %85 {strides = array<i32>} : memref<256x32xbf16, #tpu.memory_space<vmem>>, vector<256x32xbf16>,
      %87 = tpu.iota {dimensions = array<i32: 0>} : vector<256x1xi32>
      %c256_i32 = arith.constant 256 : i32
      %88 = vector.broadcast %c256_i32 : i32 to vector<256x1xi32>
      %89 = arith.cmpi slt, %87, %88 : vector<256x1xi32>
      %cst_51 = arith.constant 0.000000e+00 : f32
      %90 = vector.shape_cast %89 : vector<256x1xi1> to vector<256x1xi1>
      %91 = vector.broadcast %90 : vector<256x1xi1> to vector<256x16xi1>
      %92 = vector.broadcast %cst_51 : f32 to vector<256x16xf32>
      %93 = arith.select %91, %83, %92 : vector<256x16xi1>, vector<256x16xf32>
      %cst_52 = arith.constant dense<0.000000e+00> : vector<16xf32>
      %94 = vector.multi_reduction <add>, %93, %cst_52 [0] : vector<256x16xf32> to vector<16xf32>
      %95 = vector.shape_cast %94 : vector<16xf32> to vector<1x16xf32>
      %cst_53 = arith.constant 3.906250e-03 : f32
      %96 = vector.broadcast %cst_53 : f32 to vector<1x16xf32>
      %97 = arith.mulf %95, %96 : vector<1x16xf32>
      %98 = arith.truncf %97 : vector<1x16xf32> to vector<1x16xbf16>
      %c0_54 = arith.constant 0 : index
      %c0_55 = arith.constant 0 : index
      %99 = vector.load %arg8[%c0_54, %c0_55] : memref<16x64xbf16, #tpu.memory_space<vmem>>, vector<16x64xbf16>
      %cst_56 = arith.constant dense<0.000000e+00> : vector<1x64xf32>
      %100 = tpu.matmul %98, %99, %cst_56 {dimension_numbers = #tpu.dot_dimension_numbers<[1], [0], [0], [1], [0, 0, 1, 1], [], []>} : vector<1x16xbf16>, vector<16x64xbf16>, vector<1x64xf32> -> vector<1x64xf32>
      %c0_57 = arith.constant 0 : index
      %c0_58 = arith.constant 0 : index
      %101 = vector.load %arg16[%c0_57, %c0_58] : memref<1x64xf32, #tpu.memory_space<vmem>>, vector<1x64xf32>
      tpu.vector_store %arg16[%c0_57, %c0_58], %100 {strides = array<i32>} : memref<1x64xf32, #tpu.memory_space<vmem>>, vector<1x64xf32>,
    } else {
    }
    %c0 = arith.constant 0 : index
    %c0_1 = arith.constant 0 : index
    %c0_2 = arith.constant 0 : index
    %3 = vector.load %arg3[%c0, %c0_1, %c0_2] : memref<1x8x4xf32, #tpu.memory_space<vmem>>, vector<1x8x4xf32>
    %4 = vector.shape_cast %3 : vector<1x8x4xf32> to vector<8x4xf32>
    %5 = vector.extract_strided_slice %4 {offsets = [0, 0], sizes = [8, 1], strides = [1, 1]} : vector<8x4xf32> to vector<8x1xf32>
    %cst = arith.constant 1.000000e+00 : f32
    %6 = vector.broadcast %cst : f32 to vector<8x1xf32>
    %7 = arith.addf %5, %6 : vector<8x1xf32>
    %cst_3 = arith.constant 8.000000e+00 : f32
    %8 = vector.broadcast %cst_3 : f32 to vector<8x1xf32>
    %9 = arith.mulf %7, %8 : vector<8x1xf32>
    %10 = math.floor %9 : vector<8x1xf32>
    %cst_4 = arith.constant 0.000000e+00 : f32
    %cst_5 = arith.constant 1.500000e+01 : f32
    %11 = vector.broadcast %cst_4 : f32 to vector<8x1xf32>
    %12 = arith.maximumf %11, %10 : vector<8x1xf32>
    %13 = vector.broadcast %cst_5 : f32 to vector<8x1xf32>
    %14 = arith.minimumf %13, %12 : vector<8x1xf32>
    %15 = vector.extract_strided_slice %4 {offsets = [0, 1], sizes = [8, 1], strides = [1, 1]} : vector<8x4xf32> to vector<8x1xf32>
    %cst_6 = arith.constant 1.000000e+00 : f32
    %16 = vector.broadcast %cst_6 : f32 to vector<8x1xf32>
    %17 = arith.addf %15, %16 : vector<8x1xf32>
    %cst_7 = arith.constant 8.000000e+00 : f32
    %18 = vector.broadcast %cst_7 : f32 to vector<8x1xf32>
    %19 = arith.mulf %17, %18 : vector<8x1xf32>
    %20 = math.floor %19 : vector<8x1xf32>
    %cst_8 = arith.constant 0.000000e+00 : f32
    %cst_9 = arith.constant 1.500000e+01 : f32
    %21 = vector.broadcast %cst_8 : f32 to vector<8x1xf32>
    %22 = arith.maximumf %21, %20 : vector<8x1xf32>
    %23 = vector.broadcast %cst_9 : f32 to vector<8x1xf32>
    %24 = arith.minimumf %23, %22 : vector<8x1xf32>
    %25 = arith.fptosi %14 : vector<8x1xf32> to vector<8x1xi32>
    %c16_i32 = arith.constant 16 : i32
    %26 = vector.broadcast %c16_i32 : i32 to vector<8x1xi32>
    %27 = arith.muli %25, %26 : vector<8x1xi32>
    %28 = arith.fptosi %24 : vector<8x1xf32> to vector<8x1xi32>
    %29 = arith.addi %27, %28 : vector<8x1xi32>
    %30 = tpu.iota {dimensions = array<i32: 1>} : vector<8x256xi32>
    %31 = vector.broadcast %29 : vector<8x1xi32> to vector<8x256xi32>
    %32 = arith.cmpi eq, %30, %31 : vector<8x256xi32>
    %33 = arith.extui %32 : vector<8x256xi1> to vector<8x256xi32>
    %34 = arith.sitofp %33 : vector<8x256xi32> to vector<8x256xf32>
    %35 = arith.truncf %34 : vector<8x256xf32> to vector<8x256xbf16>
    %c0_10 = arith.constant 0 : index
    %c0_11 = arith.constant 0 : index
    %36 = vector.load %arg15[%c0_10, %c0_11] : memref<256x32xbf16, #tpu.memory_space<vmem>>, vector<256x32xbf16>
    %cst_12 = arith.constant dense<0.000000e+00> : vector<8x32xf32>
    %37 = tpu.matmul %35, %36, %cst_12 {dimension_numbers = #tpu.dot_dimension_numbers<[1], [0], [0], [1], [0, 0, 1, 1], [], []>} : vector<8x256xbf16>, vector<256x32xbf16>, vector<8x32xf32> -> vector<8x32xf32>
    %38 = arith.truncf %37 : vector<8x32xf32> to vector<8x32xbf16>
    %c0_13 = arith.constant 0 : index
    %c0_14 = arith.constant 0 : index
    %39 = vector.load %arg6[%c0_13, %c0_14] : memref<32x64xbf16, #tpu.memory_space<vmem>>, vector<32x64xbf16>
    %cst_15 = arith.constant dense<0.000000e+00> : vector<8x64xf32>
    %40 = tpu.matmul %38, %39, %cst_15 {dimension_numbers = #tpu.dot_dimension_numbers<[1], [0], [0], [1], [0, 0, 1, 1], [], []>} : vector<8x32xbf16>, vector<32x64xbf16>, vector<8x64xf32> -> vector<8x64xf32>
    %41 = arith.truncf %4 : vector<8x4xf32> to vector<8x4xbf16>
    %c0_16 = arith.constant 0 : index
    %c0_17 = arith.constant 0 : index
    %42 = vector.load %arg7[%c0_16, %c0_17] : memref<4x64xbf16, #tpu.memory_space<vmem>>, vector<4x64xbf16>
    %cst_18 = arith.constant dense<0.000000e+00> : vector<8x64xf32>
    %43 = tpu.matmul %41, %42, %cst_18 {dimension_numbers = #tpu.dot_dimension_numbers<[1], [0], [0], [1], [0, 0, 1, 1], [], []>} : vector<8x4xbf16>, vector<4x64xbf16>, vector<8x64xf32> -> vector<8x64xf32>
    %44 = arith.addf %40, %43 : vector<8x64xf32>
    %c0_19 = arith.constant 0 : index
    %c0_20 = arith.constant 0 : index
    %45 = vector.load %arg16[%c0_19, %c0_20] : memref<1x64xf32, #tpu.memory_space<vmem>>, vector<1x64xf32>
    %46 = vector.broadcast %45 : vector<1x64xf32> to vector<8x64xf32>
    %47 = arith.addf %44, %46 : vector<8x64xf32>
    %c0_21 = arith.constant 0 : index
    %c0_22 = arith.constant 0 : index
    %48 = vector.load %arg9[%c0_21, %c0_22] : memref<1x64xf32, #tpu.memory_space<vmem>>, vector<1x64xf32>
    %49 = vector.broadcast %48 : vector<1x64xf32> to vector<8x64xf32>
    %50 = arith.addf %47, %49 : vector<8x64xf32>
    %cst_23 = arith.constant 0.000000e+00 : f32
    %51 = vector.broadcast %cst_23 : f32 to vector<8x64xf32>
    %52 = arith.maximumf %50, %51 : vector<8x64xf32>
    %53 = arith.truncf %52 : vector<8x64xf32> to vector<8x64xbf16>
    %c0_24 = arith.constant 0 : index
    %c0_25 = arith.constant 0 : index
    %54 = vector.load %arg10[%c0_24, %c0_25] : memref<64x64xbf16, #tpu.memory_space<vmem>>, vector<64x64xbf16>
    %cst_26 = arith.constant dense<0.000000e+00> : vector<8x64xf32>
    %55 = tpu.matmul %53, %54, %cst_26 {dimension_numbers = #tpu.dot_dimension_numbers<[1], [0], [0], [1], [0, 0, 1, 1], [], []>} : vector<8x64xbf16>, vector<64x64xbf16>, vector<8x64xf32> -> vector<8x64xf32>
    %c0_27 = arith.constant 0 : index
    %c0_28 = arith.constant 0 : index
    %56 = vector.load %arg11[%c0_27, %c0_28] : memref<1x64xf32, #tpu.memory_space<vmem>>, vector<1x64xf32>
    %57 = vector.broadcast %56 : vector<1x64xf32> to vector<8x64xf32>
    %58 = arith.addf %55, %57 : vector<8x64xf32>
    %cst_29 = arith.constant 0.000000e+00 : f32
    %59 = vector.broadcast %cst_29 : f32 to vector<8x64xf32>
    %60 = arith.maximumf %58, %59 : vector<8x64xf32>
    %61 = arith.truncf %60 : vector<8x64xf32> to vector<8x64xbf16>
    %c0_30 = arith.constant 0 : index
    %c0_31 = arith.constant 0 : index
    %62 = vector.load %arg12[%c0_30, %c0_31] : memref<64x3xbf16, #tpu.memory_space<vmem>>, vector<64x3xbf16>
    %cst_32 = arith.constant dense<0.000000e+00> : vector<8x3xf32>
    %63 = tpu.matmul %61, %62, %cst_32 {dimension_numbers = #tpu.dot_dimension_numbers<[1], [0], [0], [1], [0, 0, 1, 1], [], []>} : vector<8x64xbf16>, vector<64x3xbf16>, vector<8x3xf32> -> vector<8x3xf32>
    %c0_33 = arith.constant 0 : index
    %c0_34 = arith.constant 0 : index
    %64 = vector.load %arg13[%c0_33, %c0_34] : memref<1x3xf32, #tpu.memory_space<vmem>>, vector<1x3xf32>
    %65 = vector.broadcast %64 : vector<1x3xf32> to vector<8x3xf32>
    %66 = arith.addf %63, %65 : vector<8x3xf32>
    %cst_35 = arith.constant 0.000000e+00 : f32
    %cst_36 = arith.constant 1.000000e+00 : f32
    %67 = vector.broadcast %cst_35 : f32 to vector<8x3xf32>
    %68 = arith.maximumf %67, %66 : vector<8x3xf32>
    %69 = vector.broadcast %cst_36 : f32 to vector<8x3xf32>
    %70 = arith.minimumf %69, %68 : vector<8x3xf32>
    %c0_37 = arith.constant 0 : index
    %c0_38 = arith.constant 0 : index
    %c0_39 = arith.constant 0 : index
    %71 = vector.load %arg14[%c0_37, %c0_38, %c0_39] : memref<1x8x3xf32, #tpu.memory_space<vmem>>, vector<1x8x3xf32>
    %72 = vector.shape_cast %71 : vector<1x8x3xf32> to vector<8x3xf32>
    %73 = vector.shape_cast %70 : vector<8x3xf32> to vector<1x8x3xf32>
    tpu.vector_store %arg14[%c0_37, %c0_38, %c0_39], %73 {strides = array<i32>} : memref<1x8x3xf32, #tpu.memory_space<vmem>>, vector<1x8x3xf32>,
    return
  }
  func.func @transform_0(%arg0: i32, %arg1: i32) -> (i32, i32, i32) {
    %c0_i32 = arith.constant 0 : i32
    %c0_i32_0 = arith.constant 0 : i32
    %c0_i32_1 = arith.constant 0 : i32
    return %arg0, %c0_i32, %c0_i32_0 : i32, i32, i32
  }
  func.func @transform_1(%arg0: i32, %arg1: i32) -> (i32, i32, i32) {
    %c0_i32 = arith.constant 0 : i32
    %c0_i32_0 = arith.constant 0 : i32
    return %arg0, %arg1, %c0_i32 : i32, i32, i32
  }
  func.func @transform_2(%arg0: i32, %arg1: i32) -> (i32, i32) {
    %c0_i32 = arith.constant 0 : i32
    %c0_i32_0 = arith.constant 0 : i32
    %c0_i32_1 = arith.constant 0 : i32
    return %c0_i32, %c0_i32_0 : i32, i32
  }
  func.func @transform_3(%arg0: i32, %arg1: i32) -> (i32, i32) {
    %c0_i32 = arith.constant 0 : i32
    %c0_i32_0 = arith.constant 0 : i32
    %c0_i32_1 = arith.constant 0 : i32
    return %c0_i32, %c0_i32_0 : i32, i32
  }
  func.func @transform_4(%arg0: i32, %arg1: i32) -> (i32, i32) {
    %c0_i32 = arith.constant 0 : i32
    %c0_i32_0 = arith.constant 0 : i32
    %c0_i32_1 = arith.constant 0 : i32
    return %c0_i32, %c0_i32_0 : i32, i32
  }
  func.func @transform_5(%arg0: i32, %arg1: i32) -> (i32, i32) {
    %c0_i32 = arith.constant 0 : i32
    %c0_i32_0 = arith.constant 0 : i32
    %c0_i32_1 = arith.constant 0 : i32
    return %c0_i32, %c0_i32_0 : i32, i32
  }
  func.func @transform_6(%arg0: i32, %arg1: i32) -> (i32, i32) {
    %c0_i32 = arith.constant 0 : i32
    %c0_i32_0 = arith.constant 0 : i32
    %c0_i32_1 = arith.constant 0 : i32
    return %c0_i32, %c0_i32_0 : i32, i32
  }
  func.func @transform_7(%arg0: i32, %arg1: i32) -> (i32, i32) {
    %c0_i32 = arith.constant 0 : i32
    %c0_i32_0 = arith.constant 0 : i32
    %c0_i32_1 = arith.constant 0 : i32
    return %c0_i32, %c0_i32_0 : i32, i32
  }
  func.func @transform_8(%arg0: i32, %arg1: i32) -> (i32, i32) {
    %c0_i32 = arith.constant 0 : i32
    %c0_i32_0 = arith.constant 0 : i32
    %c0_i32_1 = arith.constant 0 : i32
    return %c0_i32, %c0_i32_0 : i32, i32
  }
  func.func @transform_9(%arg0: i32, %arg1: i32) -> (i32, i32) {
    %c0_i32 = arith.constant 0 : i32
    %c0_i32_0 = arith.constant 0 : i32
    %c0_i32_1 = arith.constant 0 : i32
    return %c0_i32, %c0_i32_0 : i32, i32
  }
  func.func @transform_10(%arg0: i32, %arg1: i32) -> (i32, i32) {
    %c0_i32 = arith.constant 0 : i32
    %c0_i32_0 = arith.constant 0 : i32
    %c0_i32_1 = arith.constant 0 : i32
    return %c0_i32, %c0_i32_0 : i32, i32
  }
  func.func @transform_11(%arg0: i32, %arg1: i32) -> (i32, i32) {
    %c0_i32 = arith.constant 0 : i32
    %c0_i32_0 = arith.constant 0 : i32
    %c0_i32_1 = arith.constant 0 : i32
    return %c0_i32, %c0_i32_0 : i32, i32
  }
  func.func @transform_12(%arg0: i32, %arg1: i32) -> (i32, i32, i32) {
    %c0_i32 = arith.constant 0 : i32
    %c0_i32_0 = arith.constant 0 : i32
    return %arg0, %arg1, %c0_i32 : i32, i32, i32
  }
}

</mosaic_0001>

<llo_original>
// kernel: tpu_custom_call.1
$region0: #{tpu_custom_call.1}
  #allocation0 [shape = 'u32[]', space=smem, size = 0x4, offset = 0x4, fixed_abs, tag = 'smem constant byte address 0x4 - core index']
  #allocation1 [shape = 'u32[144,128]{1,0:T(1,128)}', space=vmem, size = 0x12000, scoped, tag = 'internal scratch']
  #allocation2 [shape = 'bf16[256,32]{1,0:T(16,128)(2,1)}', space=vmem, size = 0x10000, scoped, tag = 'scratch operand']
  #allocation3 [shape = 'f32[1,64]{1,0:T(1,128)}', space=vmem, size = 0x200, scoped, tag = 'scratch operand']
  %s0 = inlined_call_operand.vmem [shape: bf16[2,256,27], index: 0, kind: input, shape index: {}]
  %s1 = inlined_call_operand.vmem [shape: f32[2,8,4], index: 1, kind: input, shape index: {}]
  %s2 = inlined_call_operand.vmem [shape: bf16[27,48], index: 2, kind: input, shape index: {}]
  %s3 = inlined_call_operand.vmem [shape: f32[1,48], index: 3, kind: input, shape index: {}]
  %s4 = inlined_call_operand.vmem [shape: bf16[32,64], index: 4, kind: input, shape index: {}]
  %s5 = inlined_call_operand.vmem [shape: bf16[4,64], index: 5, kind: input, shape index: {}]
  %s6 = inlined_call_operand.vmem [shape: bf16[16,64], index: 6, kind: input, shape index: {}]
  %s7 = inlined_call_operand.vmem [shape: f32[1,64], index: 7, kind: input, shape index: {}]
  %s8 = inlined_call_operand.vmem [shape: bf16[64,64], index: 8, kind: input, shape index: {}]
  %s9 = inlined_call_operand.vmem [shape: f32[1,64], index: 9, kind: input, shape index: {}]
  %s10 = inlined_call_operand.vmem [shape: bf16[64,3], index: 10, kind: input, shape index: {}]
  %s11 = inlined_call_operand.vmem [shape: f32[1,3], index: 11, kind: input, shape index: {}]
  %s12 = inlined_call_operand.vmem [shape: f32[2,8,3], index: 12, kind: output, shape index: {}]
  %s13 = sld [smem:[#allocation0]]
  $region85: #{tpu_custom_call.1} parent=0
    _
  %s15 = ssub.s32 1, %s13
  %s16 = scalar_select 0, %s15, %s13
  loop: start=0, step=1, limit=4
  $region2: #{tpu_custom_call.1} parent=0 // loop_pre_header
    _
  $region3: #{tpu_custom_call.1} parent=0 // loop_header
    %s18 = sphi 0, %s22
    %p19 = scmp.ge.s32.totalorder %s18, 4
    %s25 = sphi 0, %s37
    %s26 = sphi 0, %s33
    %s27 = sphi 0, %s25
    %s28 = sphi 0, %s26
    %s29 = sphi 0, %s27
    %s30 = sphi 0, %s28
    %s40 = sphi 0, %s42
    %s43 = sphi 0, %s40
    %s44 = sphi 0, %s43
    %s60 = sphi 0, %s44
    %s68 = sphi 0, %s70
    %s71 = sphi 0, %s68
    %s72 = sphi 0, %s71
    %s88 = sphi 0, %s72
    %s92 = sphi 0, %s92
    %s94 = sphi 0, %s92
    %s95 = sphi 0, %s94
    %s109 = sphi 0, %s95
    %s113 = sphi 0, %s113
    %s115 = sphi 0, %s113
    %s116 = sphi 0, %s115
    %s130 = sphi 0, %s116
    %s134 = sphi 0, %s134
    %s136 = sphi 0, %s134
    %s137 = sphi 0, %s136
    %s151 = sphi 0, %s137
    %s155 = sphi 0, %s155
    %s157 = sphi 0, %s155
    %s158 = sphi 0, %s157
    %s172 = sphi 0, %s158
    %s176 = sphi 0, %s176
    %s178 = sphi 0, %s176
    %s179 = sphi 0, %s178
    %s193 = sphi 0, %s179
    %s197 = sphi 0, %s197
    %s199 = sphi 0, %s197
    %s200 = sphi 0, %s199
    %s214 = sphi 0, %s200
    %s218 = sphi 0, %s218
    %s220 = sphi 0, %s218
    %s221 = sphi 0, %s220
    %s235 = sphi 0, %s221
    %s239 = sphi 0, %s239
    %s241 = sphi 0, %s239
    %s242 = sphi 0, %s241
    %s256 = sphi 0, %s242
    %s260 = sphi 0, %s260
    %s262 = sphi 0, %s260
    %s263 = sphi 0, %s262
    %s277 = sphi 0, %s263
    %s281 = sphi 0, %s281
    %s283 = sphi 0, %s281
    %s284 = sphi 0, %s283
    %s298 = sphi 0, %s284
    %s306 = sphi 0, %s308
    %s309 = sphi 0, %s306
    %s310 = sphi 0, %s309
    %s326 = sphi 0, %s310
  $region4: #{tpu_custom_call.1} parent=0 // loop_header_branch
    %21 = sbr.rel (%p19) target = $region8
  $region5: #{tpu_custom_call.1} parent=0 // loop_body
    %s23 = ssub.s32 %s18, 1
    %s24 = ssub.s32 %s18, 2
    %s31 = sadd.s32 1, %s26
    %p32 = scmp.ge.s32.totalorder %s31, 1
    %s33 = scalar_select %p32, 0, %s31
    %s34 = sadd.s32 1, %s25
    %s35 = scalar_select %p32, %s34, %s25
    %p36 = scmp.ge.s32.totalorder %s35, 2
    %s37 = scalar_select %p36, 0, %s35
    %s38 = ssub.s32 %s25, %s37
    %p39 = scmp.eq.s32.totalorder %s38, 0
    %s41 = sadd.s32 %s40, 1
    %s42 = scalar_select %p39, %s40, %s41
    %p45 = pneg %p39
    %p46 = scmp.eq.s32.totalorder %s18, 1
    %p47 = por %p45, %p46
    %p48 = scmp.ne.s32.totalorder %s40, %s43
    %p49 = scmp.eq.s32.totalorder %s18, 0
    %p50 = por %p48, %p49
    %p51 = scmp.ne.s32.totalorder %s40, %s43
    %p52 = scmp.eq.s32.totalorder %s23, 1
    %p53 = por %p51, %p52
    %p54 = scmp.ne.s32.totalorder %s43, %s44
    %p55 = scmp.eq.s32.totalorder %s23, 0
    %p56 = por %p54, %p55
    %p57 = scmp.ne.s32.totalorder %s43, %s44
    %p58 = scmp.eq.s32.totalorder %s24, 1
    %p59 = por %p57, %p58
    %p61 = scmp.ne.s32.totalorder %s44, %s60
    %p62 = scmp.eq.s32.totalorder %s24, 0
    %p63 = por %p61, %p62
    %s64 = ssub.s32 %s25, %s37
    %s65 = ssub.s32 %s26, %s33
    %s66 = sor.u32 %s64, %s65
    %p67 = scmp.eq.s32.totalorder %s66, 0
    %s69 = sadd.s32 %s68, 1
    %s70 = scalar_select %p67, %s68, %s69
    %p73 = pneg %p67
    %p74 = scmp.eq.s32.totalorder %s18, 1
    %p75 = por %p73, %p74
    %p76 = scmp.ne.s32.totalorder %s68, %s71
    %p77 = scmp.eq.s32.totalorder %s18, 0
    %p78 = por %p76, %p77
    %p79 = scmp.ne.s32.totalorder %s68, %s71
    %p80 = scmp.eq.s32.totalorder %s23, 1
    %p81 = por %p79, %p80
    %p82 = scmp.ne.s32.totalorder %s71, %s72
    %p83 = scmp.eq.s32.totalorder %s23, 0
    %p84 = por %p82, %p83
    %p85 = scmp.ne.s32.totalorder %s71, %s72
    %p86 = scmp.eq.s32.totalorder %s24, 1
    %p87 = por %p85, %p86
    %p89 = scmp.ne.s32.totalorder %s72, %s88
    %p90 = scmp.eq.s32.totalorder %s24, 0
    %p91 = por %p89, %p90
    %s93 = sadd.s32 %s92, 1
    %p96 = scmp.eq.s32.totalorder %s18, 1
    %p97 = scmp.ne.s32.totalorder %s92, %s94
    %p98 = scmp.eq.s32.totalorder %s18, 0
    %p99 = por %p97, %p98
    %p100 = scmp.ne.s32.totalorder %s92, %s94
    %p101 = scmp.eq.s32.totalorder %s23, 1
    %p102 = por %p100, %p101
    %p103 = scmp.ne.s32.totalorder %s94, %s95
    %p104 = scmp.eq.s32.totalorder %s23, 0
    %p105 = por %p103, %p104
    %p106 = scmp.ne.s32.totalorder %s94, %s95
    %p107 = scmp.eq.s32.totalorder %s24, 1
    %p108 = por %p106, %p107
    %p110 = scmp.ne.s32.totalorder %s95, %s109
    %p111 = scmp.eq.s32.totalorder %s24, 0
    %p112 = por %p110, %p111
    %s114 = sadd.s32 %s113, 1
    %p117 = scmp.eq.s32.totalorder %s18, 1
    %p118 = scmp.ne.s32.totalorder %s113, %s115
    %p119 = scmp.eq.s32.totalorder %s18, 0
    %p120 = por %p118, %p119
    %p121 = scmp.ne.s32.totalorder %s113, %s115
    %p122 = scmp.eq.s32.totalorder %s23, 1
    %p123 = por %p121, %p122
    %p124 = scmp.ne.s32.totalorder %s115, %s116
    %p125 = scmp.eq.s32.totalorder %s23, 0
    %p126 = por %p124, %p125
    %p127 = scmp.ne.s32.totalorder %s115, %s116
    %p128 = scmp.eq.s32.totalorder %s24, 1
    %p129 = por %p127, %p128
    %p131 = scmp.ne.s32.totalorder %s116, %s130
    %p132 = scmp.eq.s32.totalorder %s24, 0
    %p133 = por %p131, %p132
    %s135 = sadd.s32 %s134, 1
    %p138 = scmp.eq.s32.totalorder %s18, 1
    %p139 = scmp.ne.s32.totalorder %s134, %s136
    %p140 = scmp.eq.s32.totalorder %s18, 0
    %p141 = por %p139, %p140
    %p142 = scmp.ne.s32.totalorder %s134, %s136
    %p143 = scmp.eq.s32.totalorder %s23, 1
    %p144 = por %p142, %p143
    %p145 = scmp.ne.s32.totalorder %s136, %s137
    %p146 = scmp.eq.s32.totalorder %s23, 0
    %p147 = por %p145, %p146
    %p148 = scmp.ne.s32.totalorder %s136, %s137
    %p149 = scmp.eq.s32.totalorder %s24, 1
    %p150 = por %p148, %p149
    %p152 = scmp.ne.s32.totalorder %s137, %s151
    %p153 = scmp.eq.s32.totalorder %s24, 0
    %p154 = por %p152, %p153
    %s156 = sadd.s32 %s155, 1
    %p159 = scmp.eq.s32.totalorder %s18, 1
    %p160 = scmp.ne.s32.totalorder %s155, %s157
    %p161 = scmp.eq.s32.totalorder %s18, 0
    %p162 = por %p160, %p161
    %p163 = scmp.ne.s32.totalorder %s155, %s157
    %p164 = scmp.eq.s32.totalorder %s23, 1
    %p165 = por %p163, %p164
    %p166 = scmp.ne.s32.totalorder %s157, %s158
    %p167 = scmp.eq.s32.totalorder %s23, 0
    %p168 = por %p166, %p167
    %p169 = scmp.ne.s32.totalorder %s157, %s158
    %p170 = scmp.eq.s32.totalorder %s24, 1
    %p171 = por %p169, %p170
    %p173 = scmp.ne.s32.totalorder %s158, %s172
    %p174 = scmp.eq.s32.totalorder %s24, 0
    %p175 = por %p173, %p174
    %s177 = sadd.s32 %s176, 1
    %p180 = scmp.eq.s32.totalorder %s18, 1
    %p181 = scmp.ne.s32.totalorder %s176, %s178
    %p182 = scmp.eq.s32.totalorder %s18, 0
    %p183 = por %p181, %p182
    %p184 = scmp.ne.s32.totalorder %s176, %s178
    %p185 = scmp.eq.s32.totalorder %s23, 1
    %p186 = por %p184, %p185
    %p187 = scmp.ne.s32.totalorder %s178, %s179
    %p188 = scmp.eq.s32.totalorder %s23, 0
    %p189 = por %p187, %p188
    %p190 = scmp.ne.s32.totalorder %s178, %s179
    %p191 = scmp.eq.s32.totalorder %s24, 1
    %p192 = por %p190, %p191
    %p194 = scmp.ne.s32.totalorder %s179, %s193
    %p195 = scmp.eq.s32.totalorder %s24, 0
    %p196 = por %p194, %p195
    %s198 = sadd.s32 %s197, 1
    %p201 = scmp.eq.s32.totalorder %s18, 1
    %p202 = scmp.ne.s32.totalorder %s197, %s199
    %p203 = scmp.eq.s32.totalorder %s18, 0
    %p204 = por %p202, %p203
    %p205 = scmp.ne.s32.totalorder %s197, %s199
    %p206 = scmp.eq.s32.totalorder %s23, 1
    %p207 = por %p205, %p206
    %p208 = scmp.ne.s32.totalorder %s199, %s200
    %p209 = scmp.eq.s32.totalorder %s23, 0
    %p210 = por %p208, %p209
    %p211 = scmp.ne.s32.totalorder %s199, %s200
    %p212 = scmp.eq.s32.totalorder %s24, 1
    %p213 = por %p211, %p212
    %p215 = scmp.ne.s32.totalorder %s200, %s214
    %p216 = scmp.eq.s32.totalorder %s24, 0
    %p217 = por %p215, %p216
    %s219 = sadd.s32 %s218, 1
    %p222 = scmp.eq.s32.totalorder %s18, 1
    %p223 = scmp.ne.s32.totalorder %s218, %s220
    %p224 = scmp.eq.s32.totalorder %s18, 0
    %p225 = por %p223, %p224
    %p226 = scmp.ne.s32.totalorder %s218, %s220
    %p227 = scmp.eq.s32.totalorder %s23, 1
    %p228 = por %p226, %p227
    %p229 = scmp.ne.s32.totalorder %s220, %s221
    %p230 = scmp.eq.s32.totalorder %s23, 0
    %p231 = por %p229, %p230
    %p232 = scmp.ne.s32.totalorder %s220, %s221
    %p233 = scmp.eq.s32.totalorder %s24, 1
    %p234 = por %p232, %p233
    %p236 = scmp.ne.s32.totalorder %s221, %s235
    %p237 = scmp.eq.s32.totalorder %s24, 0
    %p238 = por %p236, %p237
    %s240 = sadd.s32 %s239, 1
    %p243 = scmp.eq.s32.totalorder %s18, 1
    %p244 = scmp.ne.s32.totalorder %s239, %s241
    %p245 = scmp.eq.s32.totalorder %s18, 0
    %p246 = por %p244, %p245
    %p247 = scmp.ne.s32.totalorder %s239, %s241
    %p248 = scmp.eq.s32.totalorder %s23, 1
    %p249 = por %p247, %p248
    %p250 = scmp.ne.s32.totalorder %s241, %s242
    %p251 = scmp.eq.s32.totalorder %s23, 0
    %p252 = por %p250, %p251
    %p253 = scmp.ne.s32.totalorder %s241, %s242
    %p254 = scmp.eq.s32.totalorder %s24, 1
    %p255 = por %p253, %p254
    %p257 = scmp.ne.s32.totalorder %s242, %s256
    %p258 = scmp.eq.s32.totalorder %s24, 0
    %p259 = por %p257, %p258
    %s261 = sadd.s32 %s260, 1
    %p264 = scmp.eq.s32.totalorder %s18, 1
    %p265 = scmp.ne.s32.totalorder %s260, %s262
    %p266 = scmp.eq.s32.totalorder %s18, 0
    %p267 = por %p265, %p266
    %p268 = scmp.ne.s32.totalorder %s260, %s262
    %p269 = scmp.eq.s32.totalorder %s23, 1
    %p270 = por %p268, %p269
    %p271 = scmp.ne.s32.totalorder %s262, %s263
    %p272 = scmp.eq.s32.totalorder %s23, 0
    %p273 = por %p271, %p272
    %p274 = scmp.ne.s32.totalorder %s262, %s263
    %p275 = scmp.eq.s32.totalorder %s24, 1
    %p276 = por %p274, %p275
    %p278 = scmp.ne.s32.totalorder %s263, %s277
    %p279 = scmp.eq.s32.totalorder %s24, 0
    %p280 = por %p278, %p279
    %s282 = sadd.s32 %s281, 1
    %p285 = scmp.eq.s32.totalorder %s18, 1
    %p286 = scmp.ne.s32.totalorder %s281, %s283
    %p287 = scmp.eq.s32.totalorder %s18, 0
    %p288 = por %p286, %p287
    %p289 = scmp.ne.s32.totalorder %s281, %s283
    %p290 = scmp.eq.s32.totalorder %s23, 1
    %p291 = por %p289, %p290
    %p292 = scmp.ne.s32.totalorder %s283, %s284
    %p293 = scmp.eq.s32.totalorder %s23, 0
    %p294 = por %p292, %p293
    %p295 = scmp.ne.s32.totalorder %s283, %s284
    %p296 = scmp.eq.s32.totalorder %s24, 1
    %p297 = por %p295, %p296
    %p299 = scmp.ne.s32.totalorder %s284, %s298
    %p300 = scmp.eq.s32.totalorder %s24, 0
    %p301 = por %p299, %p300
    %s302 = ssub.s32 %s25, %s37
    %s303 = ssub.s32 %s26, %s33
    %s304 = sor.u32 %s302, %s303
    %p305 = scmp.eq.s32.totalorder %s304, 0
    %s307 = sadd.s32 %s306, 1
    %s308 = scalar_select %p305, %s306, %s307
    %p311 = pneg %p305
    %p312 = scmp.eq.s32.totalorder %s18, 1
    %p313 = por %p311, %p312
    %p314 = scmp.ne.s32.totalorder %s306, %s309
    %p315 = scmp.eq.s32.totalorder %s18, 0
    %p316 = por %p314, %p315
    %p317 = scmp.ne.s32.totalorder %s306, %s309
    %p318 = scmp.eq.s32.totalorder %s23, 1
    %p319 = por %p317, %p318
    %p320 = scmp.ne.s32.totalorder %s309, %s310
    %p321 = scmp.eq.s32.totalorder %s23, 0
    %p322 = por %p320, %p321
    %p323 = scmp.ne.s32.totalorder %s309, %s310
    %p324 = scmp.eq.s32.totalorder %s24, 1
    %p325 = por %p323, %p324
    %p327 = scmp.ne.s32.totalorder %s310, %s326
    %p328 = scmp.eq.s32.totalorder %s24, 0
    %p329 = por %p327, %p328
    %p330 = scmp.le.s32.totalorder 1, %s18
    %p331 = scmp.lt.s32.totalorder %s18, 3
    %p332 = pnand %p330, %p331
    %p333 = pneg %p332
    // Predicated region
    $region9: #{tpu_custom_call.1} parent=5 // pred_check
      _
    $region10: #{tpu_custom_call.1} parent=5 // pred_check_branch
      %335 = sbr.rel (%p332) target = $region12
    $region11: #{tpu_custom_call.1} parent=5 // pred_region
      %s336 = ssub.s32 %s18, 1
      // Predicated region
      $region13: #{tpu_custom_call.1} parent=11 // pred_check
        %p337 = pneg %p105
      $region14: #{tpu_custom_call.1} parent=11 // pred_check_branch
        %339 = sbr.rel (%p337) target = $region16
      $region15: #{tpu_custom_call.1} parent=11 // pred_region
        _
      $region16: #{tpu_custom_call.1} parent=11 // pred_fallthru
        _
      // Predicated region
      $region17: #{tpu_custom_call.1} parent=11 // pred_check
        %p340 = pneg %p126
      $region18: #{tpu_custom_call.1} parent=11 // pred_check_branch
        %342 = sbr.rel (%p340) target = $region20
      $region19: #{tpu_custom_call.1} parent=11 // pred_region
        _
      $region20: #{tpu_custom_call.1} parent=11 // pred_fallthru
        _
      // Predicated region
      $region21: #{tpu_custom_call.1} parent=11 // pred_check
        %p343 = pneg %p147
      $region22: #{tpu_custom_call.1} parent=11 // pred_check_branch
        %345 = sbr.rel (%p343) target = $region24
      $region23: #{tpu_custom_call.1} parent=11 // pred_region
        _
      $region24: #{tpu_custom_call.1} parent=11 // pred_fallthru
        _
      // Predicated region
      $region25: #{tpu_custom_call.1} parent=11 // pred_check
        %p346 = pneg %p168
      $region26: #{tpu_custom_call.1} parent=11 // pred_check_branch
        %348 = sbr.rel (%p346) target = $region28
      $region27: #{tpu_custom_call.1} parent=11 // pred_region
        _
      $region28: #{tpu_custom_call.1} parent=11 // pred_fallthru
        _
      // Predicated region
      $region29: #{tpu_custom_call.1} parent=11 // pred_check
        %p349 = pneg %p189
      $region30: #{tpu_custom_call.1} parent=11 // pred_check_branch
        %351 = sbr.rel (%p349) target = $region32
      $region31: #{tpu_custom_call.1} parent=11 // pred_region
        _
      $region32: #{tpu_custom_call.1} parent=11 // pred_fallthru
        _
      // Predicated region
      $region33: #{tpu_custom_call.1} parent=11 // pred_check
        %p352 = pneg %p210
      $region34: #{tpu_custom_call.1} parent=11 // pred_check_branch
        %354 = sbr.rel (%p352) target = $region36
      $region35: #{tpu_custom_call.1} parent=11 // pred_region
        _
      $region36: #{tpu_custom_call.1} parent=11 // pred_fallthru
        _
      // Predicated region
      $region37: #{tpu_custom_call.1} parent=11 // pred_check
        %p355 = pneg %p231
      $region38: #{tpu_custom_call.1} parent=11 // pred_check_branch
        %357 = sbr.rel (%p355) target = $region40
      $region39: #{tpu_custom_call.1} parent=11 // pred_region
        _
      $region40: #{tpu_custom_call.1} parent=11 // pred_fallthru
        _
      // Predicated region
      $region41: #{tpu_custom_call.1} parent=11 // pred_check
        %p358 = pneg %p252
      $region42: #{tpu_custom_call.1} parent=11 // pred_check_branch
        %360 = sbr.rel (%p358) target = $region44
      $region43: #{tpu_custom_call.1} parent=11 // pred_region
        _
      $region44: #{tpu_custom_call.1} parent=11 // pred_fallthru
        _
      // Predicated region
      $region45: #{tpu_custom_call.1} parent=11 // pred_check
        %p361 = pneg %p273
      $region46: #{tpu_custom_call.1} parent=11 // pred_check_branch
        %363 = sbr.rel (%p361) target = $region48
      $region47: #{tpu_custom_call.1} parent=11 // pred_region
        _
      $region48: #{tpu_custom_call.1} parent=11 // pred_fallthru
        _
      // Predicated region
      $region49: #{tpu_custom_call.1} parent=11 // pred_check
        %p364 = pneg %p294
      $region50: #{tpu_custom_call.1} parent=11 // pred_check_branch
        %366 = sbr.rel (%p364) target = $region52
      $region51: #{tpu_custom_call.1} parent=11 // pred_region
        _
      $region52: #{tpu_custom_call.1} parent=11 // pred_fallthru
        _
    $region12: #{tpu_custom_call.1} parent=5 // pred_fallthru
      _
    %p367 = scmp.lt.s32.totalorder %s18, 2
    // Predicated region
    $region53: #{tpu_custom_call.1} parent=5 // pred_check
      %p368 = pneg %p367
    $region54: #{tpu_custom_call.1} parent=5 // pred_check_branch
      %370 = sbr.rel (%p368) target = $region56
    $region55: #{tpu_custom_call.1} parent=5 // pred_region
      // Predicated region
      $region57: #{tpu_custom_call.1} parent=55 // pred_check
        %p371 = pneg %p50
      $region58: #{tpu_custom_call.1} parent=55 // pred_check_branch
        %373 = sbr.rel (%p371) target = $region60
      $region59: #{tpu_custom_call.1} parent=55 // pred_region
        %p374 = scmp.lt.s32.totalorder %s25, 1
        %s375 = scalar_select %p374, %s25, 1
        %s376 = smul.addr %s375, 32
        %s377 = smul.addr %s376, 4
        %s378 = scalar_lea.vmem %s0, %s377
      $region60: #{tpu_custom_call.1} parent=55 // pred_fallthru
        _
      // Predicated region
      $region61: #{tpu_custom_call.1} parent=55 // pred_check
        %p379 = pneg %p78
      $region62: #{tpu_custom_call.1} parent=55 // pred_check_branch
        %381 = sbr.rel (%p379) target = $region64
      $region63: #{tpu_custom_call.1} parent=55 // pred_region
        %p382 = scmp.lt.s32.totalorder %s25, 1
        %s383 = scalar_select %p382, %s25, 1
        %p384 = scmp.lt.s32.totalorder %s26, 0
        %s385 = scalar_select %p384, %s26, 0
        %s386 = sadd.s32 %s385, %s383
        %s387 = smul.addr %s386, 8
        %s388 = scalar_lea.vmem %s1, %s387
      $region64: #{tpu_custom_call.1} parent=55 // pred_fallthru
        _
    $region56: #{tpu_custom_call.1} parent=5 // pred_fallthru
      _
    %p389 = scmp.le.s32.totalorder 1, %s18
    %p390 = scmp.lt.s32.totalorder %s18, 3
    %p391 = pnand %p389, %p390
    %p392 = pneg %p391
    // Predicated region
    $region65: #{tpu_custom_call.1} parent=5 // pred_check
      _
    $region66: #{tpu_custom_call.1} parent=5 // pred_check_branch
      %394 = sbr.rel (%p391) target = $region68
    $region67: #{tpu_custom_call.1} parent=5 // pred_region
      %s395 = ssub.s32 %s18, 1
      %p396 = scmp.lt.s32.totalorder %s27, 1
      %s397 = scalar_select %p396, %s27, 1
      %s398 = smul.addr %s397, 32
      %s399 = smul.addr %s398, 4
      %s400 = scalar_lea.vmem %s0, %s399
      %p401 = pneg %p56
      %p402 = pneg %p53
      %p403 = scmp.lt.s32.totalorder %s27, 1
      %s404 = scalar_select %p403, %s27, 1
      %p405 = scmp.lt.s32.totalorder %s28, 0
      %s406 = scalar_select %p405, %s28, 0
      %s407 = sadd.s32 %s406, %s404
      %s408 = smul.addr %s407, 8
      %s409 = scalar_lea.vmem %s1, %s408
      %p410 = pneg %p84
      %p411 = pneg %p81
      %p412 = pneg %p105
      %p413 = pneg %p102
      %p414 = pneg %p126
      %p415 = pneg %p123
      %p416 = pneg %p147
      %p417 = pneg %p144
      %p418 = pneg %p168
      %p419 = pneg %p165
      %p420 = pneg %p189
      %p421 = pneg %p186
      %p422 = pneg %p210
      %p423 = pneg %p207
      %p424 = pneg %p231
      %p425 = pneg %p228
      %p426 = pneg %p252
      %p427 = pneg %p249
      %p428 = pneg %p273
      %p429 = pneg %p270
      %p430 = pneg %p294
      %p431 = pneg %p291
      %p432 = pneg %p322
      %p433 = pneg %p319
      %p434 = scmp.lt.s32.totalorder %s27, 1
      %s435 = scalar_select %p434, %s27, 1
      %p436 = scmp.lt.s32.totalorder %s28, 0
      %s437 = scalar_select %p436, %s28, 0
      %s438 = sadd.s32 %s437, %s435
      %s439 = smul.addr %s438, 8
      %s440 = scalar_lea.vmem %s12, %s439
      %p441 = scmp.lt.s32.totalorder %s27, 1
      %s442 = scalar_select %p441, %s27, 1
      %s443 = smul.addr %s442, 32
      %s444 = smul.addr %s443, 4
      %s445 = scalar_lea.vmem %s0, %s444
      %p446 = scmp.lt.s32.totalorder %s27, 1
      %s447 = scalar_select %p446, %s27, 1
      %p448 = scmp.lt.s32.totalorder %s28, 0
      %s449 = scalar_select %p448, %s28, 0
      %s450 = sadd.s32 %s449, %s447
      %s451 = smul.addr %s450, 8
      %s452 = scalar_lea.vmem %s1, %s451
      %p453 = scmp.lt.s32.totalorder %s27, 1
      %s454 = scalar_select %p453, %s27, 1
      %p455 = scmp.lt.s32.totalorder %s28, 0
      %s456 = scalar_select %p455, %s28, 0
      %s457 = sadd.s32 %s456, %s454
      %s458 = smul.addr %s457, 8
      %s459 = scalar_lea.vmem %s12, %s458
      %p461 = scmp.eq.s32.totalorder %s28, 0
      // Predicated region
      $region69: #{tpu_custom_call.1} parent=67 // pred_check
        %p462 = pneg %p461
      $region70: #{tpu_custom_call.1} parent=67 // pred_check_branch
        %464 = sbr.rel (%p462) target = $region72
      $region71: #{tpu_custom_call.1} parent=67 // pred_region
        %v465 = vld [vmem:[%s445] sm:$0xf]
        %v466 = vld [vmem:[%s445 + $0x4] sm:$0xf]
        %v467 = vld [vmem:[%s445 + $0x8] sm:$0xf]
        %v468 = vld [vmem:[%s445 + $0xc] sm:$0xf]
        %v469 = vld [vmem:[%s445 + $0x10] sm:$0xf]
        %v470 = vld [vmem:[%s445 + $0x14] sm:$0xf]
        %v471 = vld [vmem:[%s445 + $0x18] sm:$0xf]
        %v472 = vld [vmem:[%s445 + $0x1c] sm:$0xf]
        %v473 = vld [vmem:[%s445 + $0x20] sm:$0xf]
        %v474 = vld [vmem:[%s445 + $0x24] sm:$0xf]
        %v475 = vld [vmem:[%s445 + $0x28] sm:$0xf]
        %v476 = vld [vmem:[%s445 + $0x2c] sm:$0xf]
        %v477 = vld [vmem:[%s445 + $0x30] sm:$0xf]
        %v478 = vld [vmem:[%s445 + $0x34] sm:$0xf]
        %v479 = vld [vmem:[%s445 + $0x38] sm:$0xf]
        %v480 = vld [vmem:[%s445 + $0x3c] sm:$0xf]
        %v481 = vld [vmem:[%s445 + $0x40] sm:$0xf]
        %v482 = vld [vmem:[%s445 + $0x44] sm:$0xf]
        %v483 = vld [vmem:[%s445 + $0x48] sm:$0xf]
        %v484 = vld [vmem:[%s445 + $0x4c] sm:$0xf]
        %v485 = vld [vmem:[%s445 + $0x50] sm:$0xf]
        %v486 = vld [vmem:[%s445 + $0x54] sm:$0xf]
        %v487 = vld [vmem:[%s445 + $0x58] sm:$0xf]
        %v488 = vld [vmem:[%s445 + $0x5c] sm:$0xf]
        %v489 = vld [vmem:[%s445 + $0x60] sm:$0xf]
        %v490 = vld [vmem:[%s445 + $0x64] sm:$0xf]
        %v491 = vld [vmem:[%s445 + $0x68] sm:$0xf]
        %v492 = vld [vmem:[%s445 + $0x6c] sm:$0xf]
        %v493 = vld [vmem:[%s445 + $0x70] sm:$0xf]
        %v494 = vld [vmem:[%s445 + $0x74] sm:$0xf]
        %v495 = vld [vmem:[%s445 + $0x78] sm:$0xf]
        %v496 = vld [vmem:[%s445 + $0x7c] sm:$0xf]
        %v497 = vld [vmem:[%s2] sm:$0xf]
        %v498 = vld [vmem:[%s2 + $0x4] sm:$0xf]
        %v499 = vld [vmem:[%s2 + $0x8] sm:$0xf]
        %v500 = vld [vmem:[%s2 + $0xc] sm:$0x3]
        %v501 = vld [vmem:[%s3] sm:$0x1]
        %v503 = vlaneseq
        %v504 = vshrl.u32 %v503, 7
        %v505 = vsub.s32 0, %v504
        %v506 = vrot.slane %v501, %v505
        %v540 = vunpack.c.l.b16 %v465
        %v541 = vunpack.c.l.b16 %v466
        %v542 = vunpack.c.l.b16 %v467
        %v543 = vunpack.c.l.b16 %v468
        %v544 = vunpack.c.l.b16 %v469
        %v545 = vunpack.c.l.b16 %v470
        %v546 = vunpack.c.l.b16 %v471
        %v547 = vunpack.c.l.b16 %v472
        %v548 = vunpack.c.l.b16 %v473
        %v549 = vunpack.c.l.b16 %v474
        %v550 = vunpack.c.l.b16 %v475
        %v551 = vunpack.c.l.b16 %v476
        %v552 = vunpack.c.l.b16 %v477
        %v553 = vunpack.c.l.b16 %v478
        %v554 = vunpack.c.l.b16 %v479
        %v555 = vunpack.c.l.b16 %v480
        %v556 = vunpack.c.l.b16 %v481
        %v557 = vunpack.c.l.b16 %v482
        %v558 = vunpack.c.l.b16 %v483
        %v559 = vunpack.c.l.b16 %v484
        %v560 = vunpack.c.l.b16 %v485
        %v561 = vunpack.c.l.b16 %v486
        %v562 = vunpack.c.l.b16 %v487
        %v563 = vunpack.c.l.b16 %v488
        %v564 = vunpack.c.l.b16 %v489
        %v565 = vunpack.c.l.b16 %v490
        %v566 = vunpack.c.l.b16 %v491
        %v567 = vunpack.c.l.b16 %v492
        %v568 = vunpack.c.l.b16 %v493
        %v569 = vunpack.c.l.b16 %v494
        %v570 = vunpack.c.l.b16 %v495
        %v571 = vunpack.c.l.b16 %v496
        %v572 = vpack.c.b16 %v541, %v540
        %v573 = vpack.c.b16 %v543, %v542
        %v574 = vpack.c.b16 %v545, %v544
        %v575 = vpack.c.b16 %v547, %v546
        %v576 = vpack.c.b16 %v549, %v548
        %v577 = vpack.c.b16 %v551, %v550
        %v578 = vpack.c.b16 %v553, %v552
        %v579 = vpack.c.b16 %v555, %v554
        %v580 = vpack.c.b16 %v557, %v556
        %v581 = vpack.c.b16 %v559, %v558
        %v582 = vpack.c.b16 %v561, %v560
        %v583 = vpack.c.b16 %v563, %v562
        %v584 = vpack.c.b16 %v565, %v564
        %v585 = vpack.c.b16 %v567, %v566
        %v586 = vpack.c.b16 %v569, %v568
        %v587 = vpack.c.b16 %v571, %v570
        %v592 = vunpack.c.l.b16 %v497
        %v593 = vunpack.c.l.b16 %v498
        %v594 = vunpack.c.l.b16 %v499
        %v595 = vunpack.c.l.b16 %v500
        %v596 = vpack.c.b16 %v593, %v592
        %v597 = vpack.c.b16 %v595, %v594
        %vm599 = vcmask 220160
        %v601 = vsel %vm599, %v572, 0
        %v604 = vsel %vm599, %v573, 0
        %v607 = vsel %vm599, %v574, 0
        %v610 = vsel %vm599, %v575, 0
        %v613 = vsel %vm599, %v576, 0
        %v616 = vsel %vm599, %v577, 0
        %v619 = vsel %vm599, %v578, 0
        %v622 = vsel %vm599, %v579, 0
        %v625 = vsel %vm599, %v580, 0
        %v628 = vsel %vm599, %v581, 0
        %v631 = vsel %vm599, %v582, 0
        %v634 = vsel %vm599, %v583, 0
        %v637 = vsel %vm599, %v584, 0
        %v640 = vsel %vm599, %v585, 0
        %v643 = vsel %vm599, %v586, 0
        %v646 = vsel %vm599, %v587, 0
        %vm648 = vcmask 1044480
        %vm649 = vcmask 1045504
        %v650 = vsel %vm648, 4294967295, 65535
        %v651 = vsel %vm649, %v650, 0
        %v653 = vand.u32 %v597, %v651
        %655 = vmatprep.subr.bf16.mxu0 0
        %656 = vmatpush1.bf16.msra.mxu0 %v596
        %657 = vmatprep.subr.bf16.mxu0 0
        %658 = vmatpush1.bf16.msra.mxu0 %v653
        %659 = vmatprep.subr.bf16.mxu0 0
        %660 = vmatpush1.bf16.msra.mxu0 0
        %661 = vmatprep.subr.bf16.mxu0 0
        %662 = vmatpush1.bf16.msra.mxu0 0
        %663 = vmatprep.subr.bf16.mxu0 0
        %664 = vmatpush1.bf16.msra.mxu0 0
        %665 = vmatprep.subr.bf16.mxu0 0
        %666 = vmatpush1.bf16.msra.mxu0 0
        %667 = vmatprep.subr.bf16.mxu0 0
        %668 = vmatpush1.bf16.msra.mxu0 0
        %669 = vmatprep.subr.bf16.mxu0 0
        %670 = vmatpush1.bf16.msra.mxu0 0
        %671 = vmatprep.subr.bf16.mxu0 0
        %672 = vmatpush1.bf16.msra.mxu0 0
        %673 = vmatprep.subr.bf16.mxu0 0
        %674 = vmatpush1.bf16.msra.mxu0 0
        %675 = vmatprep.subr.bf16.mxu0 0
        %676 = vmatpush1.bf16.msra.mxu0 0
        %677 = vmatprep.subr.bf16.mxu0 0
        %678 = vmatpush1.bf16.msra.mxu0 0
        %679 = vmatprep.subr.bf16.mxu0 0
        %680 = vmatpush1.bf16.msra.mxu0 0
        %681 = vmatprep.subr.bf16.mxu0 0
        %682 = vmatpush1.bf16.msra.mxu0 0
        %683 = vmatprep.subr.bf16.mxu0 0
        %684 = vmatpush1.bf16.msra.mxu0 0
        %685 = vmatprep.subr.bf16.mxu0 0
        %686 = vmatpush1.bf16.msra.mxu0 0
        %687 = vmatprep.mubr.bf16.mxu0 0
        %688 = vmatmul.mubr.bf16.gmra.mrb[0].mxu0 %v601
        %v689 = vpop.f32.mrb[0].mxu0
        %v690 = vadd.f32 %v506, %v689
        %v691 = vpop.f32.mrb[0].mxu0
        %v692 = vpop.f32.mrb[0].mxu0
        %v693 = vadd.f32 %v506, %v692
        %v694 = vpop.f32.mrb[0].mxu0
        %695 = vmatprep.mubr.bf16.mxu0 0
        %696 = vmatmul.mubr.bf16.gmra.mrb[0].mxu0 %v604
        %v697 = vpop.f32.mrb[0].mxu0
        %v698 = vadd.f32 %v506, %v697
        %v699 = vpop.f32.mrb[0].mxu0
        %v700 = vpop.f32.mrb[0].mxu0
        %v701 = vadd.f32 %v506, %v700
        %v702 = vpop.f32.mrb[0].mxu0
        %703 = vmatprep.mubr.bf16.mxu0 0
        %704 = vmatmul.mubr.bf16.gmra.mrb[0].mxu0 %v607
        %v705 = vpop.f32.mrb[0].mxu0
        %v706 = vadd.f32 %v506, %v705
        %v707 = vpop.f32.mrb[0].mxu0
        %v708 = vpop.f32.mrb[0].mxu0
        %v709 = vadd.f32 %v506, %v708
        %v710 = vpop.f32.mrb[0].mxu0
        %711 = vmatprep.mubr.bf16.mxu0 0
        %712 = vmatmul.mubr.bf16.gmra.mrb[0].mxu0 %v610
        %v713 = vpop.f32.mrb[0].mxu0
        %v714 = vadd.f32 %v506, %v713
        %v715 = vpop.f32.mrb[0].mxu0
        %v716 = vpop.f32.mrb[0].mxu0
        %v717 = vadd.f32 %v506, %v716
        %v718 = vpop.f32.mrb[0].mxu0
        %719 = vmatprep.mubr.bf16.mxu0 0
        %720 = vmatmul.mubr.bf16.gmra.mrb[0].mxu0 %v613
        %v721 = vpop.f32.mrb[0].mxu0
        %v722 = vadd.f32 %v506, %v721
        %v723 = vpop.f32.mrb[0].mxu0
        %v724 = vpop.f32.mrb[0].mxu0
        %v725 = vadd.f32 %v506, %v724
        %v726 = vpop.f32.mrb[0].mxu0
        %727 = vmatprep.mubr.bf16.mxu0 0
        %728 = vmatmul.mubr.bf16.gmra.mrb[0].mxu0 %v616
        %v729 = vpop.f32.mrb[0].mxu0
        %v730 = vadd.f32 %v506, %v729
        %v731 = vpop.f32.mrb[0].mxu0
        %v732 = vpop.f32.mrb[0].mxu0
        %v733 = vadd.f32 %v506, %v732
        %v734 = vpop.f32.mrb[0].mxu0
        %735 = vmatprep.mubr.bf16.mxu0 0
        %736 = vmatmul.mubr.bf16.gmra.mrb[0].mxu0 %v619
        %v737 = vpop.f32.mrb[0].mxu0
        %v738 = vadd.f32 %v506, %v737
        %v739 = vpop.f32.mrb[0].mxu0
        %v740 = vpop.f32.mrb[0].mxu0
        %v741 = vadd.f32 %v506, %v740
        %v742 = vpop.f32.mrb[0].mxu0
        %743 = vmatprep.mubr.bf16.mxu0 0
        %744 = vmatmul.mubr.bf16.gmra.mrb[0].mxu0 %v622
        %v745 = vpop.f32.mrb[0].mxu0
        %v746 = vadd.f32 %v506, %v745
        %v747 = vpop.f32.mrb[0].mxu0
        %v748 = vpop.f32.mrb[0].mxu0
        %v749 = vadd.f32 %v506, %v748
        %v750 = vpop.f32.mrb[0].mxu0
        %751 = vmatprep.mubr.bf16.mxu0 0
        %752 = vmatmul.mubr.bf16.gmra.mrb[0].mxu0 %v625
        %v753 = vpop.f32.mrb[0].mxu0
        %v754 = vadd.f32 %v506, %v753
        %v755 = vpop.f32.mrb[0].mxu0
        %v756 = vpop.f32.mrb[0].mxu0
        %v757 = vadd.f32 %v506, %v756
        %v758 = vpop.f32.mrb[0].mxu0
        %759 = vmatprep.mubr.bf16.mxu0 0
        %760 = vmatmul.mubr.bf16.gmra.mrb[0].mxu0 %v628
        %v761 = vpop.f32.mrb[0].mxu0
        %v762 = vadd.f32 %v506, %v761
        %v763 = vpop.f32.mrb[0].mxu0
        %v764 = vpop.f32.mrb[0].mxu0
        %v765 = vadd.f32 %v506, %v764
        %v766 = vpop.f32.mrb[0].mxu0
        %767 = vmatprep.mubr.bf16.mxu0 0
        %768 = vmatmul.mubr.bf16.gmra.mrb[0].mxu0 %v631
        %v769 = vpop.f32.mrb[0].mxu0
        %v770 = vadd.f32 %v506, %v769
        %v771 = vpop.f32.mrb[0].mxu0
        %v772 = vpop.f32.mrb[0].mxu0
        %v773 = vadd.f32 %v506, %v772
        %v774 = vpop.f32.mrb[0].mxu0
        %775 = vmatprep.mubr.bf16.mxu0 0
        %776 = vmatmul.mubr.bf16.gmra.mrb[0].mxu0 %v634
        %v777 = vpop.f32.mrb[0].mxu0
        %v778 = vadd.f32 %v506, %v777
        %v779 = vpop.f32.mrb[0].mxu0
        %v780 = vpop.f32.mrb[0].mxu0
        %v781 = vadd.f32 %v506, %v780
        %v782 = vpop.f32.mrb[0].mxu0
        %783 = vmatprep.mubr.bf16.mxu0 0
        %784 = vmatmul.mubr.bf16.gmra.mrb[0].mxu0 %v637
        %v785 = vpop.f32.mrb[0].mxu0
        %v786 = vadd.f32 %v506, %v785
        %v787 = vpop.f32.mrb[0].mxu0
        %v788 = vpop.f32.mrb[0].mxu0
        %v789 = vadd.f32 %v506, %v788
        %v790 = vpop.f32.mrb[0].mxu0
        %791 = vmatprep.mubr.bf16.mxu0 0
        %792 = vmatmul.mubr.bf16.gmra.mrb[0].mxu0 %v640
        %v793 = vpop.f32.mrb[0].mxu0
        %v794 = vadd.f32 %v506, %v793
        %v795 = vpop.f32.mrb[0].mxu0
        %v796 = vpop.f32.mrb[0].mxu0
        %v797 = vadd.f32 %v506, %v796
        %v798 = vpop.f32.mrb[0].mxu0
        %799 = vmatprep.mubr.bf16.mxu0 0
        %800 = vmatmul.mubr.bf16.gmra.mrb[0].mxu0 %v643
        %v801 = vpop.f32.mrb[0].mxu0
        %v802 = vadd.f32 %v506, %v801
        %v803 = vpop.f32.mrb[0].mxu0
        %v804 = vpop.f32.mrb[0].mxu0
        %v805 = vadd.f32 %v506, %v804
        %v806 = vpop.f32.mrb[0].mxu0
        %807 = vmatprep.mubr.bf16.mxu0 0
        %808 = vmatmul.mubr.bf16.gmra.mrb[0].mxu0 %v646
        %v809 = vpop.f32.mrb[0].mxu0
        %v810 = vadd.f32 %v506, %v809
        %v811 = vpop.f32.mrb[0].mxu0
        %v812 = vpop.f32.mrb[0].mxu0
        %v813 = vadd.f32 %v506, %v812
        %v814 = vpop.f32.mrb[0].mxu0
        %815 = vdwg.mxu0
        %v816 = vmax.f32 %v690, 0.0
        %v817 = vmax.f32 %v693, 0.0
        %v818 = vmax.f32 %v698, 0.0
        %v819 = vmax.f32 %v701, 0.0
        %v820 = vmax.f32 %v706, 0.0
        %v821 = vmax.f32 %v709, 0.0
        %v822 = vmax.f32 %v714, 0.0
        %v823 = vmax.f32 %v717, 0.0
        %v824 = vmax.f32 %v722, 0.0
        %v825 = vmax.f32 %v725, 0.0
        %v826 = vmax.f32 %v730, 0.0
        %v827 = vmax.f32 %v733, 0.0
        %v828 = vmax.f32 %v738, 0.0
        %v829 = vmax.f32 %v741, 0.0
        %v830 = vmax.f32 %v746, 0.0
        %v831 = vmax.f32 %v749, 0.0
        %v832 = vmax.f32 %v754, 0.0
        %v833 = vmax.f32 %v757, 0.0
        %v834 = vmax.f32 %v762, 0.0
        %v835 = vmax.f32 %v765, 0.0
        %v836 = vmax.f32 %v770, 0.0
        %v837 = vmax.f32 %v773, 0.0
        %v838 = vmax.f32 %v778, 0.0
        %v839 = vmax.f32 %v781, 0.0
        %v840 = vmax.f32 %v786, 0.0
        %v841 = vmax.f32 %v789, 0.0
        %v842 = vmax.f32 %v794, 0.0
        %v843 = vmax.f32 %v797, 0.0
        %v844 = vmax.f32 %v802, 0.0
        %v845 = vmax.f32 %v805, 0.0
        %v846 = vmax.f32 %v810, 0.0
        %v847 = vmax.f32 %v813, 0.0
        %v848 = vpack.c.bf16 %v817, %v816
        %v849 = vpack.c.bf16 %v819, %v818
        %v850 = vpack.c.bf16 %v821, %v820
        %v851 = vpack.c.bf16 %v823, %v822
        %v852 = vpack.c.bf16 %v825, %v824
        %v853 = vpack.c.bf16 %v827, %v826
        %v854 = vpack.c.bf16 %v829, %v828
        %v855 = vpack.c.bf16 %v831, %v830
        %v856 = vpack.c.bf16 %v833, %v832
        %v857 = vpack.c.bf16 %v835, %v834
        %v858 = vpack.c.bf16 %v837, %v836
        %v859 = vpack.c.bf16 %v839, %v838
        %v860 = vpack.c.bf16 %v841, %v840
        %v861 = vpack.c.bf16 %v843, %v842
        %v862 = vpack.c.bf16 %v845, %v844
        %v863 = vpack.c.bf16 %v847, %v846
        %880 = vrot.lane.b32.xlu0 %v848, 112
        %v881 = vpop.permute.xlu0 %880
        %882 = vrot.lane.b32.xlu0 %v849, 112
        %v883 = vpop.permute.xlu0 %882
        %884 = vrot.lane.b32.xlu0 %v850, 112
        %v885 = vpop.permute.xlu0 %884
        %886 = vrot.lane.b32.xlu0 %v851, 112
        %v887 = vpop.permute.xlu0 %886
        %888 = vrot.lane.b32.xlu0 %v852, 112
        %v889 = vpop.permute.xlu0 %888
        %890 = vrot.lane.b32.xlu0 %v853, 112
        %v891 = vpop.permute.xlu0 %890
        %892 = vrot.lane.b32.xlu0 %v854, 112
        %v893 = vpop.permute.xlu0 %892
        %894 = vrot.lane.b32.xlu0 %v855, 112
        %v895 = vpop.permute.xlu0 %894
        %896 = vrot.lane.b32.xlu0 %v856, 112
        %v897 = vpop.permute.xlu0 %896
        %898 = vrot.lane.b32.xlu0 %v857, 112
        %v899 = vpop.permute.xlu0 %898
        %900 = vrot.lane.b32.xlu0 %v858, 112
        %v901 = vpop.permute.xlu0 %900
        %902 = vrot.lane.b32.xlu0 %v859, 112
        %v903 = vpop.permute.xlu0 %902
        %904 = vrot.lane.b32.xlu0 %v860, 112
        %v905 = vpop.permute.xlu0 %904
        %906 = vrot.lane.b32.xlu0 %v861, 112
        %v907 = vpop.permute.xlu0 %906
        %908 = vrot.lane.b32.xlu0 %v862, 112
        %v909 = vpop.permute.xlu0 %908
        %910 = vrot.lane.b32.xlu0 %v863, 112
        %v911 = vpop.permute.xlu0 %910
        %vm928 = vcmask 261120
        %929 = vst.msk [vmem:[#allocation2] sm:$0xff] %vm928, %v881
        %930 = vst.msk [vmem:[#allocation2 + $0x8] sm:$0xff] %vm928, %v883
        %931 = vst.msk [vmem:[#allocation2 + $0x10] sm:$0xff] %vm928, %v885
        %932 = vst.msk [vmem:[#allocation2 + $0x18] sm:$0xff] %vm928, %v887
        %933 = vst.msk [vmem:[#allocation2 + $0x20] sm:$0xff] %vm928, %v889
        %934 = vst.msk [vmem:[#allocation2 + $0x28] sm:$0xff] %vm928, %v891
        %935 = vst.msk [vmem:[#allocation2 + $0x30] sm:$0xff] %vm928, %v893
        %936 = vst.msk [vmem:[#allocation2 + $0x38] sm:$0xff] %vm928, %v895
        %937 = vst.msk [vmem:[#allocation2 + $0x40] sm:$0xff] %vm928, %v897
        %938 = vst.msk [vmem:[#allocation2 + $0x48] sm:$0xff] %vm928, %v899
        %939 = vst.msk [vmem:[#allocation2 + $0x50] sm:$0xff] %vm928, %v901
        %940 = vst.msk [vmem:[#allocation2 + $0x58] sm:$0xff] %vm928, %v903
        %941 = vst.msk [vmem:[#allocation2 + $0x60] sm:$0xff] %vm928, %v905
        %942 = vst.msk [vmem:[#allocation2 + $0x68] sm:$0xff] %vm928, %v907
        %943 = vst.msk [vmem:[#allocation2 + $0x70] sm:$0xff] %vm928, %v909
        %944 = vst.msk [vmem:[#allocation2 + $0x78] sm:$0xff] %vm928, %v911
        %v945 = vlaneseq
        %v946 = vshrl.u32 %v945, 7
        %v947 = vadd.s32 %v946, 8
        %v948 = vadd.s32 %v946, 16
        %v949 = vadd.s32 %v946, 24
        %v950 = vadd.s32 %v946, 32
        %v951 = vadd.s32 %v946, 40
        %v952 = vadd.s32 %v946, 48
        %v953 = vadd.s32 %v946, 56
        %v954 = vadd.s32 %v946, 64
        %v955 = vadd.s32 %v946, 72
        %v956 = vadd.s32 %v946, 80
        %v957 = vadd.s32 %v946, 88
        %v958 = vadd.s32 %v946, 96
        %v959 = vadd.s32 %v946, 104
        %v960 = vadd.s32 %v946, 112
        %v961 = vadd.s32 %v946, 120
        %v962 = vadd.s32 %v946, 128
        %v963 = vadd.s32 %v946, 136
        %v964 = vadd.s32 %v946, 144
        %v965 = vadd.s32 %v946, 152
        %v966 = vadd.s32 %v946, 160
        %v967 = vadd.s32 %v946, 168
        %v968 = vadd.s32 %v946, 176
        %v969 = vadd.s32 %v946, 184
        %v970 = vadd.s32 %v946, 192
        %v971 = vadd.s32 %v946, 200
        %v972 = vadd.s32 %v946, 208
        %v973 = vadd.s32 %v946, 216
        %v974 = vadd.s32 %v946, 224
        %v975 = vadd.s32 %v946, 232
        %v976 = vadd.s32 %v946, 240
        %v977 = vadd.s32 %v946, 248
        %vm978 = vcmp.lt.s32.totalorder %v946, 256
        %vm979 = vcmp.lt.s32.totalorder %v947, 256
        %vm980 = vcmp.lt.s32.totalorder %v948, 256
        %vm981 = vcmp.lt.s32.totalorder %v949, 256
        %vm982 = vcmp.lt.s32.totalorder %v950, 256
        %vm983 = vcmp.lt.s32.totalorder %v951, 256
        %vm984 = vcmp.lt.s32.totalorder %v952, 256
        %vm985 = vcmp.lt.s32.totalorder %v953, 256
        %vm986 = vcmp.lt.s32.totalorder %v954, 256
        %vm987 = vcmp.lt.s32.totalorder %v955, 256
        %vm988 = vcmp.lt.s32.totalorder %v956, 256
        %vm989 = vcmp.lt.s32.totalorder %v957, 256
        %vm990 = vcmp.lt.s32.totalorder %v958, 256
        %vm991 = vcmp.lt.s32.totalorder %v959, 256
        %vm992 = vcmp.lt.s32.totalorder %v960, 256
        %vm993 = vcmp.lt.s32.totalorder %v961, 256
        %vm994 = vcmp.lt.s32.totalorder %v962, 256
        %vm995 = vcmp.lt.s32.totalorder %v963, 256
        %vm996 = vcmp.lt.s32.totalorder %v964, 256
        %vm997 = vcmp.lt.s32.totalorder %v965, 256
        %vm998 = vcmp.lt.s32.totalorder %v966, 256
        %vm999 = vcmp.lt.s32.totalorder %v967, 256
        %vm1000 = vcmp.lt.s32.totalorder %v968, 256
        %vm1001 = vcmp.lt.s32.totalorder %v969, 256
        %vm1002 = vcmp.lt.s32.totalorder %v970, 256
        %vm1003 = vcmp.lt.s32.totalorder %v971, 256
        %vm1004 = vcmp.lt.s32.totalorder %v972, 256
        %vm1005 = vcmp.lt.s32.totalorder %v973, 256
        %vm1006 = vcmp.lt.s32.totalorder %v974, 256
        %vm1007 = vcmp.lt.s32.totalorder %v975, 256
        %vm1008 = vcmp.lt.s32.totalorder %v976, 256
        %vm1009 = vcmp.lt.s32.totalorder %v977, 256
        %v1010 = vsel %vm978, 1, 0
        %v1011 = vsel %vm979, 1, 0
        %v1012 = vsel %vm980, 1, 0
        %v1013 = vsel %vm981, 1, 0
        %v1014 = vsel %vm982, 1, 0
        %v1015 = vsel %vm983, 1, 0
        %v1016 = vsel %vm984, 1, 0
        %v1017 = vsel %vm985, 1, 0
        %v1018 = vsel %vm986, 1, 0
        %v1019 = vsel %vm987, 1, 0
        %v1020 = vsel %vm988, 1, 0
        %v1021 = vsel %vm989, 1, 0
        %v1022 = vsel %vm990, 1, 0
        %v1023 = vsel %vm991, 1, 0
        %v1024 = vsel %vm992, 1, 0
        %v1025 = vsel %vm993, 1, 0
        %v1026 = vsel %vm994, 1, 0
        %v1027 = vsel %vm995, 1, 0
        %v1028 = vsel %vm996, 1, 0
        %v1029 = vsel %vm997, 1, 0
        %v1030 = vsel %vm998, 1, 0
        %v1031 = vsel %vm999, 1, 0
        %v1032 = vsel %vm1000, 1, 0
        %v1033 = vsel %vm1001, 1, 0
        %v1034 = vsel %vm1002, 1, 0
        %v1035 = vsel %vm1003, 1, 0
        %v1036 = vsel %vm1004, 1, 0
        %v1037 = vsel %vm1005, 1, 0
        %v1038 = vsel %vm1006, 1, 0
        %v1039 = vsel %vm1007, 1, 0
        %v1040 = vsel %vm1008, 1, 0
        %v1041 = vsel %vm1009, 1, 0
        %vm1042 = vcmp.eq.s32.totalorder %v1010, 1
        %vm1043 = vcmp.eq.s32.totalorder %v1011, 1
        %vm1044 = vcmp.eq.s32.totalorder %v1012, 1
        %vm1045 = vcmp.eq.s32.totalorder %v1013, 1
        %vm1046 = vcmp.eq.s32.totalorder %v1014, 1
        %vm1047 = vcmp.eq.s32.totalorder %v1015, 1
        %vm1048 = vcmp.eq.s32.totalorder %v1016, 1
        %vm1049 = vcmp.eq.s32.totalorder %v1017, 1
        %vm1050 = vcmp.eq.s32.totalorder %v1018, 1
        %vm1051 = vcmp.eq.s32.totalorder %v1019, 1
        %vm1052 = vcmp.eq.s32.totalorder %v1020, 1
        %vm1053 = vcmp.eq.s32.totalorder %v1021, 1
        %vm1054 = vcmp.eq.s32.totalorder %v1022, 1
        %vm1055 = vcmp.eq.s32.totalorder %v1023, 1
        %vm1056 = vcmp.eq.s32.totalorder %v1024, 1
        %vm1057 = vcmp.eq.s32.totalorder %v1025, 1
        %vm1058 = vcmp.eq.s32.totalorder %v1026, 1
        %vm1059 = vcmp.eq.s32.totalorder %v1027, 1
        %vm1060 = vcmp.eq.s32.totalorder %v1028, 1
        %vm1061 = vcmp.eq.s32.totalorder %v1029, 1
        %vm1062 = vcmp.eq.s32.totalorder %v1030, 1
        %vm1063 = vcmp.eq.s32.totalorder %v1031, 1
        %vm1064 = vcmp.eq.s32.totalorder %v1032, 1
        %vm1065 = vcmp.eq.s32.totalorder %v1033, 1
        %vm1066 = vcmp.eq.s32.totalorder %v1034, 1
        %vm1067 = vcmp.eq.s32.totalorder %v1035, 1
        %vm1068 = vcmp.eq.s32.totalorder %v1036, 1
        %vm1069 = vcmp.eq.s32.totalorder %v1037, 1
        %vm1070 = vcmp.eq.s32.totalorder %v1038, 1
        %vm1071 = vcmp.eq.s32.totalorder %v1039, 1
        %vm1072 = vcmp.eq.s32.totalorder %v1040, 1
        %vm1073 = vcmp.eq.s32.totalorder %v1041, 1
        %v1074 = vsel %vm1042, %v816, 0.0
        %v1075 = vsel %vm1043, %v817, 0.0
        %v1076 = vsel %vm1044, %v818, 0.0
        %v1077 = vsel %vm1045, %v819, 0.0
        %v1078 = vsel %vm1046, %v820, 0.0
        %v1079 = vsel %vm1047, %v821, 0.0
        %v1080 = vsel %vm1048, %v822, 0.0
        %v1081 = vsel %vm1049, %v823, 0.0
        %v1082 = vsel %vm1050, %v824, 0.0
        %v1083 = vsel %vm1051, %v825, 0.0
        %v1084 = vsel %vm1052, %v826, 0.0
        %v1085 = vsel %vm1053, %v827, 0.0
        %v1086 = vsel %vm1054, %v828, 0.0
        %v1087 = vsel %vm1055, %v829, 0.0
        %v1088 = vsel %vm1056, %v830, 0.0
        %v1089 = vsel %vm1057, %v831, 0.0
        %v1090 = vsel %vm1058, %v832, 0.0
        %v1091 = vsel %vm1059, %v833, 0.0
        %v1092 = vsel %vm1060, %v834, 0.0
        %v1093 = vsel %vm1061, %v835, 0.0
        %v1094 = vsel %vm1062, %v836, 0.0
        %v1095 = vsel %vm1063, %v837, 0.0
        %v1096 = vsel %vm1064, %v838, 0.0
        %v1097 = vsel %vm1065, %v839, 0.0
        %v1098 = vsel %vm1066, %v840, 0.0
        %v1099 = vsel %vm1067, %v841, 0.0
        %v1100 = vsel %vm1068, %v842, 0.0
        %v1101 = vsel %vm1069, %v843, 0.0
        %v1102 = vsel %vm1070, %v844, 0.0
        %v1103 = vsel %vm1071, %v845, 0.0
        %v1104 = vsel %vm1072, %v846, 0.0
        %v1105 = vsel %vm1073, %v847, 0.0
        %vm1106 = vcmask 130048
        %v1107 = vsel %vm1106, %v1074, 0.0
        %v1108 = vsel %vm1106, %v1075, 0.0
        %v1109 = vadd.f32 %v1107, %v1108
        %v1110 = vsel %vm1106, %v1076, 0.0
        %v1111 = vadd.f32 %v1109, %v1110
        %v1112 = vsel %vm1106, %v1077, 0.0
        %v1113 = vadd.f32 %v1111, %v1112
        %v1114 = vsel %vm1106, %v1078, 0.0
        %v1115 = vadd.f32 %v1113, %v1114
        %v1116 = vsel %vm1106, %v1079, 0.0
        %v1117 = vadd.f32 %v1115, %v1116
        %v1118 = vsel %vm1106, %v1080, 0.0
        %v1119 = vadd.f32 %v1117, %v1118
        %v1120 = vsel %vm1106, %v1081, 0.0
        %v1121 = vadd.f32 %v1119, %v1120
        %v1122 = vsel %vm1106, %v1082, 0.0
        %v1123 = vadd.f32 %v1121, %v1122
        %v1124 = vsel %vm1106, %v1083, 0.0
        %v1125 = vadd.f32 %v1123, %v1124
        %v1126 = vsel %vm1106, %v1084, 0.0
        %v1127 = vadd.f32 %v1125, %v1126
        %v1128 = vsel %vm1106, %v1085, 0.0
        %v1129 = vadd.f32 %v1127, %v1128
        %v1130 = vsel %vm1106, %v1086, 0.0
        %v1131 = vadd.f32 %v1129, %v1130
        %v1132 = vsel %vm1106, %v1087, 0.0
        %v1133 = vadd.f32 %v1131, %v1132
        %v1134 = vsel %vm1106, %v1088, 0.0
        %v1135 = vadd.f32 %v1133, %v1134
        %v1136 = vsel %vm1106, %v1089, 0.0
        %v1137 = vadd.f32 %v1135, %v1136
        %v1138 = vsel %vm1106, %v1090, 0.0
        %v1139 = vadd.f32 %v1137, %v1138
        %v1140 = vsel %vm1106, %v1091, 0.0
        %v1141 = vadd.f32 %v1139, %v1140
        %v1142 = vsel %vm1106, %v1092, 0.0
        %v1143 = vadd.f32 %v1141, %v1142
        %v1144 = vsel %vm1106, %v1093, 0.0
        %v1145 = vadd.f32 %v1143, %v1144
        %v1146 = vsel %vm1106, %v1094, 0.0
        %v1147 = vadd.f32 %v1145, %v1146
        %v1148 = vsel %vm1106, %v1095, 0.0
        %v1149 = vadd.f32 %v1147, %v1148
        %v1150 = vsel %vm1106, %v1096, 0.0
        %v1151 = vadd.f32 %v1149, %v1150
        %v1152 = vsel %vm1106, %v1097, 0.0
        %v1153 = vadd.f32 %v1151, %v1152
        %v1154 = vsel %vm1106, %v1098, 0.0
        %v1155 = vadd.f32 %v1153, %v1154
        %v1156 = vsel %vm1106, %v1099, 0.0
        %v1157 = vadd.f32 %v1155, %v1156
        %v1158 = vsel %vm1106, %v1100, 0.0
        %v1159 = vadd.f32 %v1157, %v1158
        %v1160 = vsel %vm1106, %v1101, 0.0
        %v1161 = vadd.f32 %v1159, %v1160
        %v1162 = vsel %vm1106, %v1102, 0.0
        %v1163 = vadd.f32 %v1161, %v1162
        %v1164 = vsel %vm1106, %v1103, 0.0
        %v1165 = vadd.f32 %v1163, %v1164
        %v1166 = vsel %vm1106, %v1104, 0.0
        %v1167 = vadd.f32 %v1165, %v1166
        %v1168 = vsel %vm1106, %v1105, 0.0
        %v1169 = vadd.f32 %v1167, %v1168
        %v1170 = vrot.slane %v1169, 4
        %v1171 = vadd.f32 %v1169, %v1170
        %v1172 = vrot.slane %v1171, 2
        %v1173 = vadd.f32 %v1171, %v1172
        %v1174 = vrot.slane %v1173, 1
        %v1175 = vadd.f32 %v1173, %v1174
        %v1176 = vmul.f32 %v1175, 0.00390625
        %v1177 = vpack.c.bf16 %v1176, %v1176
        %v1178 = vld [vmem:[%s6] sm:$0xf]
        %v1179 = vld [vmem:[%s6 + $0x4] sm:$0xf]
        %v1182 = vunpack.c.l.b16 %v1178
        %v1183 = vunpack.c.l.b16 %v1179
        %v1184 = vpack.c.b16 %v1183, %v1182
        %v1187 = vsel %vm1106, %v1177, 0
        %1189 = vmatprep.subr.bf16.mxu0 0
        %1190 = vmatpush1.bf16.msra.mxu0 %v1184
        %1191 = vmatprep.subr.bf16.mxu0 0
        %1192 = vmatpush1.bf16.msra.mxu0 0
        %1193 = vmatprep.subr.bf16.mxu0 0
        %1194 = vmatpush1.bf16.msra.mxu0 0
        %1195 = vmatprep.subr.bf16.mxu0 0
        %1196 = vmatpush1.bf16.msra.mxu0 0
        %1197 = vmatprep.subr.bf16.mxu0 0
        %1198 = vmatpush1.bf16.msra.mxu0 0
        %1199 = vmatprep.subr.bf16.mxu0 0
        %1200 = vmatpush1.bf16.msra.mxu0 0
        %1201 = vmatprep.subr.bf16.mxu0 0
        %1202 = vmatpush1.bf16.msra.mxu0 0
        %1203 = vmatprep.subr.bf16.mxu0 0
        %1204 = vmatpush1.bf16.msra.mxu0 0
        %1205 = vmatprep.subr.bf16.mxu0 0
        %1206 = vmatpush1.bf16.msra.mxu0 0
        %1207 = vmatprep.subr.bf16.mxu0 0
        %1208 = vmatpush1.bf16.msra.mxu0 0
        %1209 = vmatprep.subr.bf16.mxu0 0
        %1210 = vmatpush1.bf16.msra.mxu0 0
        %1211 = vmatprep.subr.bf16.mxu0 0
        %1212 = vmatpush1.bf16.msra.mxu0 0
        %1213 = vmatprep.subr.bf16.mxu0 0
        %1214 = vmatpush1.bf16.msra.mxu0 0
        %1215 = vmatprep.subr.bf16.mxu0 0
        %1216 = vmatpush1.bf16.msra.mxu0 0
        %1217 = vmatprep.subr.bf16.mxu0 0
        %1218 = vmatpush1.bf16.msra.mxu0 0
        %1219 = vmatprep.subr.bf16.mxu0 0
        %1220 = vmatpush1.bf16.msra.mxu0 0
        %1221 = vmatprep.mubr.bf16.mxu0 0
        %1222 = vmatmul.mubr.bf16.gmra.mrb[0].mxu0 %v1187
        %v1223 = vpop.f32.mrb[0].mxu0
        %v1224 = vadd.f32 0.0, %v1223
        %v1225 = vpop.f32.mrb[0].mxu0
        %v1226 = vpop.f32.mrb[0].mxu0
        %v1227 = vpop.f32.mrb[0].mxu0
        %1228 = vdwg.mxu0
        %vm1229 = vcmask 516096
        %1230 = vst.msk [vmem:[#allocation3] sm:$0x1] %vm1229, %v1224
      $region72: #{tpu_custom_call.1} parent=67 // pred_fallthru
        _
      %v1231 = vld [vmem:[%s452] sm:$0xff]
      %v1232 = vadd.f32 %v1231, 1.0
      %v1233 = vmul.f32 %v1232, 8.0
      %v1234 = vfloor.f32 %v1233
      %v1235 = vmax.f32 %v1234, 0.0
      %v1236 = vmin.f32 %v1235, 15.0
      %v1237 = vcvt.f32.s32.to.zero.pseudo %v1236
      %v1238 = vmul.u32 %v1237, 16
      %1239 = vrot.lane.b32.xlu0 %v1237, 127
      %v1240 = vpop.permute.xlu0 %1239
      %v1241 = vadd.s32 %v1238, %v1240
      %v1242 = vlaneseq
      %v1243 = vand.u32 %v1242, 127
      %v1244 = vadd.s32 %v1243, 128
      %1245 = vset.pattern.permute.xlu0 0
      %1246 = vperm.xlu0 %1245, %v1241
      %v1247 = vpop.permute.xlu0 %1246
      %vm1248 = vcmp.eq.s32.totalorder %v1243, %v1247
      %vm1249 = vcmp.eq.s32.totalorder %v1244, %v1247
      %v1250 = vsel %vm1248, 1, 0
      %v1251 = vsel %vm1249, 1, 0
      %v1252 = vcvt.s32.f32 %v1250
      %v1253 = vcvt.s32.f32 %v1251
      %v1254 = vpack.c.bf16 %v1252, %v1252
      %v1255 = vpack.c.bf16 %v1253, %v1253
      %v1256 = vld [vmem:[#allocation2] sm:$0xff]
      %v1257 = vld [vmem:[#allocation2 + $0x8] sm:$0xff]
      %v1258 = vld [vmem:[#allocation2 + $0x10] sm:$0xff]
      %v1259 = vld [vmem:[#allocation2 + $0x18] sm:$0xff]
      %v1260 = vld [vmem:[#allocation2 + $0x20] sm:$0xff]
      %v1261 = vld [vmem:[#allocation2 + $0x28] sm:$0xff]
      %v1262 = vld [vmem:[#allocation2 + $0x30] sm:$0xff]
      %v1263 = vld [vmem:[#allocation2 + $0x38] sm:$0xff]
      %v1264 = vld [vmem:[#allocation2 + $0x40] sm:$0xff]
      %v1265 = vld [vmem:[#allocation2 + $0x48] sm:$0xff]
      %v1266 = vld [vmem:[#allocation2 + $0x50] sm:$0xff]
      %v1267 = vld [vmem:[#allocation2 + $0x58] sm:$0xff]
      %v1268 = vld [vmem:[#allocation2 + $0x60] sm:$0xff]
      %v1269 = vld [vmem:[#allocation2 + $0x68] sm:$0xff]
      %v1270 = vld [vmem:[#allocation2 + $0x70] sm:$0xff]
      %v1271 = vld [vmem:[#allocation2 + $0x78] sm:$0xff]
      %1272 = vmatprep.subr.bf16.mxu0 0
      %1273 = vmatpush1.bf16.msra.mxu0 %v1256
      %1274 = vmatprep.subr.bf16.mxu0 0
      %1275 = vmatpush1.bf16.msra.mxu0 %v1257
      %1276 = vmatprep.subr.bf16.mxu0 0
      %1277 = vmatpush1.bf16.msra.mxu0 %v1258
      %1278 = vmatprep.subr.bf16.mxu0 0
      %1279 = vmatpush1.bf16.msra.mxu0 %v1259
      %1280 = vmatprep.subr.bf16.mxu0 0
      %1281 = vmatpush1.bf16.msra.mxu0 %v1260
      %1282 = vmatprep.subr.bf16.mxu0 0
      %1283 = vmatpush1.bf16.msra.mxu0 %v1261
      %1284 = vmatprep.subr.bf16.mxu0 0
      %1285 = vmatpush1.bf16.msra.mxu0 %v1262
      %1286 = vmatprep.subr.bf16.mxu0 0
      %1287 = vmatpush1.bf16.msra.mxu0 %v1263
      %1288 = vmatprep.subr.bf16.mxu0 0
      %1289 = vmatpush1.bf16.msra.mxu0 %v1264
      %1290 = vmatprep.subr.bf16.mxu0 0
      %1291 = vmatpush1.bf16.msra.mxu0 %v1265
      %1292 = vmatprep.subr.bf16.mxu0 0
      %1293 = vmatpush1.bf16.msra.mxu0 %v1266
      %1294 = vmatprep.subr.bf16.mxu0 0
      %1295 = vmatpush1.bf16.msra.mxu0 %v1267
      %1296 = vmatprep.subr.bf16.mxu0 0
      %1297 = vmatpush1.bf16.msra.mxu0 %v1268
      %1298 = vmatprep.subr.bf16.mxu0 0
      %1299 = vmatpush1.bf16.msra.mxu0 %v1269
      %1300 = vmatprep.subr.bf16.mxu0 0
      %1301 = vmatpush1.bf16.msra.mxu0 %v1270
      %1302 = vmatprep.subr.bf16.mxu0 0
      %1303 = vmatpush1.bf16.msra.mxu0 %v1271
      %1304 = vmatprep.mubr.bf16.mxu0 %v1255
      %1305 = vmatmul.mubr.bf16.gmra.mrb[0].mxu0 %v1254
      %v1306 = vpop.f32.mrb[0].mxu0
      %v1307 = vadd.f32 0.0, %v1306
      %v1308 = vpop.f32.mrb[0].mxu0
      %v1309 = vpop.f32.mrb[0].mxu0
      %v1310 = vpop.f32.mrb[0].mxu0
      %1311 = vdwg.mxu0
      %v1312 = vpack.c.bf16 %v1307, %v1307
      %v1313 = vld [vmem:[%s4] sm:$0xf]
      %v1314 = vld [vmem:[%s4 + $0x4] sm:$0xf]
      %v1315 = vld [vmem:[%s4 + $0x8] sm:$0xf]
      %v1316 = vld [vmem:[%s4 + $0xc] sm:$0xf]
      %v1317 = vpack.c.bf16 %v1231, %v1231
      %v1318 = vld [vmem:[%s5] sm:$0x3]
      %vm1319 = vcmask 31744
      %v1321 = vsel %vm1319, %v1317, 0
      %vm1323 = vcmask 1041408
      %v1325 = vsel %vm1323, %v1318, 0
      %1327 = vmatprep.subr.bf16.mxu0 0
      %1328 = vmatpush1.bf16.msra.mxu0 %v1325
      %1329 = vmatprep.subr.bf16.mxu0 0
      %1330 = vmatpush1.bf16.msra.mxu0 0
      %1331 = vmatprep.subr.bf16.mxu0 0
      %1332 = vmatpush1.bf16.msra.mxu0 0
      %1333 = vmatprep.subr.bf16.mxu0 0
      %1334 = vmatpush1.bf16.msra.mxu0 0
      %1335 = vmatprep.subr.bf16.mxu0 0
      %1336 = vmatpush1.bf16.msra.mxu0 0
      %1337 = vmatprep.subr.bf16.mxu0 0
      %1338 = vmatpush1.bf16.msra.mxu0 0
      %1339 = vmatprep.subr.bf16.mxu0 0
      %1340 = vmatpush1.bf16.msra.mxu0 0
      %1341 = vmatprep.subr.bf16.mxu0 0
      %1342 = vmatpush1.bf16.msra.mxu0 0
      %1343 = vmatprep.subr.bf16.mxu0 0
      %1344 = vmatpush1.bf16.msra.mxu0 0
      %1345 = vmatprep.subr.bf16.mxu0 0
      %1346 = vmatpush1.bf16.msra.mxu0 0
      %1347 = vmatprep.subr.bf16.mxu0 0
      %1348 = vmatpush1.bf16.msra.mxu0 0
      %1349 = vmatprep.subr.bf16.mxu0 0
      %1350 = vmatpush1.bf16.msra.mxu0 0
      %1351 = vmatprep.subr.bf16.mxu0 0
      %1352 = vmatpush1.bf16.msra.mxu0 0
      %1353 = vmatprep.subr.bf16.mxu0 0
      %1354 = vmatpush1.bf16.msra.mxu0 0
      %1355 = vmatprep.subr.bf16.mxu0 0
      %1356 = vmatpush1.bf16.msra.mxu0 0
      %1357 = vmatprep.subr.bf16.mxu0 0
      %1358 = vmatpush1.bf16.msra.mxu0 0
      %1359 = vmatprep.mubr.bf16.mxu0 0
      %1360 = vmatmul.mubr.bf16.gmra.mrb[0].mxu0 %v1321
      %v1361 = vpop.f32.mrb[0].mxu0
      %v1362 = vadd.f32 0.0, %v1361
      %v1363 = vpop.f32.mrb[0].mxu0
      %v1364 = vpop.f32.mrb[0].mxu0
      %v1365 = vpop.f32.mrb[0].mxu0
      %1366 = vdwg.mxu0
      %v1371 = vunpack.c.l.b16 %v1313
      %v1372 = vunpack.c.l.b16 %v1314
      %v1373 = vunpack.c.l.b16 %v1315
      %v1374 = vunpack.c.l.b16 %v1316
      %v1375 = vpack.c.b16 %v1372, %v1371
      %v1376 = vpack.c.b16 %v1374, %v1373
      %vm1379 = vcmask 261120
      %v1381 = vsel %vm1379, %v1312, 0
      %1383 = vmatprep.subr.bf16.mxu0 0
      %1384 = vmatpush1.bf16.msra.mxu0 %v1375
      %1385 = vmatprep.subr.bf16.mxu0 0
      %1386 = vmatpush1.bf16.msra.mxu0 %v1376
      %1387 = vmatprep.subr.bf16.mxu0 0
      %1388 = vmatpush1.bf16.msra.mxu0 0
      %1389 = vmatprep.subr.bf16.mxu0 0
      %1390 = vmatpush1.bf16.msra.mxu0 0
      %1391 = vmatprep.subr.bf16.mxu0 0
      %1392 = vmatpush1.bf16.msra.mxu0 0
      %1393 = vmatprep.subr.bf16.mxu0 0
      %1394 = vmatpush1.bf16.msra.mxu0 0
      %1395 = vmatprep.subr.bf16.mxu0 0
      %1396 = vmatpush1.bf16.msra.mxu0 0
      %1397 = vmatprep.subr.bf16.mxu0 0
      %1398 = vmatpush1.bf16.msra.mxu0 0
      %1399 = vmatprep.subr.bf16.mxu0 0
      %1400 = vmatpush1.bf16.msra.mxu0 0
      %1401 = vmatprep.subr.bf16.mxu0 0
      %1402 = vmatpush1.bf16.msra.mxu0 0
      %1403 = vmatprep.subr.bf16.mxu0 0
      %1404 = vmatpush1.bf16.msra.mxu0 0
      %1405 = vmatprep.subr.bf16.mxu0 0
      %1406 = vmatpush1.bf16.msra.mxu0 0
      %1407 = vmatprep.subr.bf16.mxu0 0
      %1408 = vmatpush1.bf16.msra.mxu0 0
      %1409 = vmatprep.subr.bf16.mxu0 0
      %1410 = vmatpush1.bf16.msra.mxu0 0
      %1411 = vmatprep.subr.bf16.mxu0 0
      %1412 = vmatpush1.bf16.msra.mxu0 0
      %1413 = vmatprep.subr.bf16.mxu0 0
      %1414 = vmatpush1.bf16.msra.mxu0 0
      %1415 = vmatprep.mubr.bf16.mxu0 0
      %1416 = vmatmul.mubr.bf16.gmra.mrb[0].mxu0 %v1381
      %v1417 = vpop.f32.mrb[0].mxu0
      %v1418 = vadd.f32 %v1362, %v1417
      %v1419 = vpop.f32.mrb[0].mxu0
      %v1420 = vpop.f32.mrb[0].mxu0
      %v1421 = vpop.f32.mrb[0].mxu0
      %1422 = vdwg.mxu0
      %v1423 = vld [vmem:[#allocation3] sm:$0x1]
      %v1425 = vlaneseq
      %v1426 = vshrl.u32 %v1425, 7
      %v1427 = vsub.s32 0, %v1426
      %v1428 = vrot.slane %v1423, %v1427
      %v1430 = vadd.f32 %v1418, %v1428
      %v1431 = vld [vmem:[%s7] sm:$0x1]
      %v1433 = vlaneseq
      %v1434 = vshrl.u32 %v1433, 7
      %v1435 = vsub.s32 0, %v1434
      %v1436 = vrot.slane %v1431, %v1435
      %v1438 = vadd.f32 %v1430, %v1436
      %v1439 = vmax.f32 %v1438, 0.0
      %v1440 = vpack.c.bf16 %v1439, %v1439
      %v1441 = vld [vmem:[%s8] sm:$0xf]
      %v1442 = vld [vmem:[%s8 + $0x4] sm:$0xf]
      %v1443 = vld [vmem:[%s8 + $0x8] sm:$0xf]
      %v1444 = vld [vmem:[%s8 + $0xc] sm:$0xf]
      %v1445 = vld [vmem:[%s8 + $0x10] sm:$0xf]
      %v1446 = vld [vmem:[%s8 + $0x14] sm:$0xf]
      %v1447 = vld [vmem:[%s8 + $0x18] sm:$0xf]
      %v1448 = vld [vmem:[%s8 + $0x1c] sm:$0xf]
      %v1449 = vld [vmem:[%s9] sm:$0x1]
      %v1451 = vlaneseq
      %v1452 = vshrl.u32 %v1451, 7
      %v1453 = vsub.s32 0, %v1452
      %v1454 = vrot.slane %v1449, %v1453
      %v1464 = vunpack.c.l.b16 %v1441
      %v1465 = vunpack.c.l.b16 %v1442
      %v1466 = vunpack.c.l.b16 %v1443
      %v1467 = vunpack.c.l.b16 %v1444
      %v1468 = vunpack.c.l.b16 %v1445
      %v1469 = vunpack.c.l.b16 %v1446
      %v1470 = vunpack.c.l.b16 %v1447
      %v1471 = vunpack.c.l.b16 %v1448
      %v1472 = vpack.c.b16 %v1465, %v1464
      %v1473 = vpack.c.b16 %v1467, %v1466
      %v1474 = vpack.c.b16 %v1469, %v1468
      %v1475 = vpack.c.b16 %v1471, %v1470
      %vm1480 = vcmask 523264
      %v1482 = vsel %vm1480, %v1440, 0
      %1484 = vmatprep.subr.bf16.mxu0 0
      %1485 = vmatpush1.bf16.msra.mxu0 %v1472
      %1486 = vmatprep.subr.bf16.mxu0 0
      %1487 = vmatpush1.bf16.msra.mxu0 %v1473
      %1488 = vmatprep.subr.bf16.mxu0 0
      %1489 = vmatpush1.bf16.msra.mxu0 %v1474
      %1490 = vmatprep.subr.bf16.mxu0 0
      %1491 = vmatpush1.bf16.msra.mxu0 %v1475
      %1492 = vmatprep.subr.bf16.mxu0 0
      %1493 = vmatpush1.bf16.msra.mxu0 0
      %1494 = vmatprep.subr.bf16.mxu0 0
      %1495 = vmatpush1.bf16.msra.mxu0 0
      %1496 = vmatprep.subr.bf16.mxu0 0
      %1497 = vmatpush1.bf16.msra.mxu0 0
      %1498 = vmatprep.subr.bf16.mxu0 0
      %1499 = vmatpush1.bf16.msra.mxu0 0
      %1500 = vmatprep.subr.bf16.mxu0 0
      %1501 = vmatpush1.bf16.msra.mxu0 0
      %1502 = vmatprep.subr.bf16.mxu0 0
      %1503 = vmatpush1.bf16.msra.mxu0 0
      %1504 = vmatprep.subr.bf16.mxu0 0
      %1505 = vmatpush1.bf16.msra.mxu0 0
      %1506 = vmatprep.subr.bf16.mxu0 0
      %1507 = vmatpush1.bf16.msra.mxu0 0
      %1508 = vmatprep.subr.bf16.mxu0 0
      %1509 = vmatpush1.bf16.msra.mxu0 0
      %1510 = vmatprep.subr.bf16.mxu0 0
      %1511 = vmatpush1.bf16.msra.mxu0 0
      %1512 = vmatprep.subr.bf16.mxu0 0
      %1513 = vmatpush1.bf16.msra.mxu0 0
      %1514 = vmatprep.subr.bf16.mxu0 0
      %1515 = vmatpush1.bf16.msra.mxu0 0
      %1516 = vmatprep.mubr.bf16.mxu0 0
      %1517 = vmatmul.mubr.bf16.gmra.mrb[0].mxu0 %v1482
      %v1518 = vpop.f32.mrb[0].mxu0
      %v1519 = vadd.f32 %v1454, %v1518
      %v1520 = vpop.f32.mrb[0].mxu0
      %v1521 = vpop.f32.mrb[0].mxu0
      %v1522 = vpop.f32.mrb[0].mxu0
      %1523 = vdwg.mxu0
      %v1524 = vmax.f32 %v1519, 0.0
      %v1525 = vpack.c.bf16 %v1524, %v1524
      %v1526 = vld [vmem:[%s10] sm:$0xf]
      %v1527 = vld [vmem:[%s10 + $0x4] sm:$0xf]
      %v1528 = vld [vmem:[%s10 + $0x8] sm:$0xf]
      %v1529 = vld [vmem:[%s10 + $0xc] sm:$0xf]
      %v1530 = vld [vmem:[%s10 + $0x10] sm:$0xf]
      %v1531 = vld [vmem:[%s10 + $0x14] sm:$0xf]
      %v1532 = vld [vmem:[%s10 + $0x18] sm:$0xf]
      %v1533 = vld [vmem:[%s10 + $0x1c] sm:$0xf]
      %v1534 = vld [vmem:[%s11] sm:$0x1]
      %v1536 = vlaneseq
      %v1537 = vshrl.u32 %v1536, 7
      %v1538 = vsub.s32 0, %v1537
      %v1539 = vrot.slane %v1534, %v1538
      %v1549 = vunpack.c.l.b16 %v1526
      %v1550 = vunpack.c.l.b16 %v1527
      %v1551 = vunpack.c.l.b16 %v1528
      %v1552 = vunpack.c.l.b16 %v1529
      %v1553 = vunpack.c.l.b16 %v1530
      %v1554 = vunpack.c.l.b16 %v1531
      %v1555 = vunpack.c.l.b16 %v1532
      %v1556 = vunpack.c.l.b16 %v1533
      %v1557 = vpack.c.b16 %v1550, %v1549
      %v1558 = vpack.c.b16 %v1552, %v1551
      %v1559 = vpack.c.b16 %v1554, %v1553
      %v1560 = vpack.c.b16 %v1556, %v1555
      %v1566 = vsel %vm1480, %v1525, 0
      %1568 = vmatprep.subr.bf16.mxu0 0
      %1569 = vmatpush1.bf16.msra.mxu0 %v1557
      %1570 = vmatprep.subr.bf16.mxu0 0
      %1571 = vmatpush1.bf16.msra.mxu0 %v1558
      %1572 = vmatprep.subr.bf16.mxu0 0
      %1573 = vmatpush1.bf16.msra.mxu0 %v1559
      %1574 = vmatprep.subr.bf16.mxu0 0
      %1575 = vmatpush1.bf16.msra.mxu0 %v1560
      %1576 = vmatprep.subr.bf16.mxu0 0
      %1577 = vmatpush1.bf16.msra.mxu0 0
      %1578 = vmatprep.subr.bf16.mxu0 0
      %1579 = vmatpush1.bf16.msra.mxu0 0
      %1580 = vmatprep.subr.bf16.mxu0 0
      %1581 = vmatpush1.bf16.msra.mxu0 0
      %1582 = vmatprep.subr.bf16.mxu0 0
      %1583 = vmatpush1.bf16.msra.mxu0 0
      %1584 = vmatprep.subr.bf16.mxu0 0
      %1585 = vmatpush1.bf16.msra.mxu0 0
      %1586 = vmatprep.subr.bf16.mxu0 0
      %1587 = vmatpush1.bf16.msra.mxu0 0
      %1588 = vmatprep.subr.bf16.mxu0 0
      %1589 = vmatpush1.bf16.msra.mxu0 0
      %1590 = vmatprep.subr.bf16.mxu0 0
      %1591 = vmatpush1.bf16.msra.mxu0 0
      %1592 = vmatprep.subr.bf16.mxu0 0
      %1593 = vmatpush1.bf16.msra.mxu0 0
      %1594 = vmatprep.subr.bf16.mxu0 0
      %1595 = vmatpush1.bf16.msra.mxu0 0
      %1596 = vmatprep.subr.bf16.mxu0 0
      %1597 = vmatpush1.bf16.msra.mxu0 0
      %1598 = vmatprep.subr.bf16.mxu0 0
      %1599 = vmatpush1.bf16.msra.mxu0 0
      %1600 = vmatprep.mubr.bf16.mxu0 0
      %1601 = vmatmul.mubr.bf16.gmra.mrb[0].mxu0 %v1566
      %v1602 = vpop.f32.mrb[0].mxu0
      %v1603 = vadd.f32 %v1539, %v1602
      %v1604 = vpop.f32.mrb[0].mxu0
      %v1605 = vpop.f32.mrb[0].mxu0
      %v1606 = vpop.f32.mrb[0].mxu0
      %1607 = vdwg.mxu0
      %v1608 = vmax.f32 %v1603, 0.0
      %v1609 = vmin.f32 %v1608, 1.0
      %vm1610 = vcmask 23552
      %1611 = vst.msk [vmem:[%s459] sm:$0xff] %vm1610, %v1609
      %p1612 = scmp.lt.s32.totalorder %s27, 1
      %s1613 = scalar_select %p1612, %s27, 1
      %p1614 = scmp.lt.s32.totalorder %s28, 0
      %s1615 = scalar_select %p1614, %s28, 0
      %s1616 = sadd.s32 %s1615, %s1613
      %s1617 = smul.addr %s1616, 8
      %s1618 = scalar_lea.vmem %s12, %s1617
      // Predicated region
      $region73: #{tpu_custom_call.1} parent=67 // pred_check
        %p1619 = pneg %p319
      $region74: #{tpu_custom_call.1} parent=67 // pred_check_branch
        %1621 = sbr.rel (%p1619) target = $region76
      $region75: #{tpu_custom_call.1} parent=67 // pred_region
        _
      $region76: #{tpu_custom_call.1} parent=67 // pred_fallthru
        _
    $region68: #{tpu_custom_call.1} parent=5 // pred_fallthru
      _
    %p1622 = scmp.le.s32.totalorder 2, %s18
    // Predicated region
    $region77: #{tpu_custom_call.1} parent=5 // pred_check
      %p1623 = pneg %p1622
    $region78: #{tpu_custom_call.1} parent=5 // pred_check_branch
      %1625 = sbr.rel (%p1623) target = $region80
    $region79: #{tpu_custom_call.1} parent=5 // pred_region
      %s1626 = ssub.s32 %s18, 2
      // Predicated region
      $region81: #{tpu_custom_call.1} parent=79 // pred_check
        %p1627 = pneg %p325
      $region82: #{tpu_custom_call.1} parent=79 // pred_check_branch
        %1629 = sbr.rel (%p1627) target = $region84
      $region83: #{tpu_custom_call.1} parent=79 // pred_region
        %p1630 = scmp.lt.s32.totalorder %s29, 1
        %s1631 = scalar_select %p1630, %s29, 1
        %p1632 = scmp.lt.s32.totalorder %s30, 0
        %s1633 = scalar_select %p1632, %s30, 0
        %s1634 = sadd.s32 %s1633, %s1631
        %s1635 = smul.addr %s1634, 8
        %s1636 = scalar_lea.vmem %s12, %s1635
      $region84: #{tpu_custom_call.1} parent=79 // pred_fallthru
        _
    $region80: #{tpu_custom_call.1} parent=5 // pred_fallthru
      _
  $region6: #{tpu_custom_call.1} parent=0 // loop_footer
    %s22 = sadd.s32 1, %s18
  $region7: #{tpu_custom_call.1} parent=0 // loop_footer_branch
    %17 = sbr.rel target = $region3
  $region8: #{tpu_custom_call.1} parent=0 // loop_exit
    _

</llo_original>
